<compile_context>
chip_gen: v7x
topology: tpu7x:2x2x1
jax: 0.10.0
libtpu: 0.0.40
codegen_flags: <defaults>
</compile_context>

<pallas_src>
import functools

import jax
import jax.numpy as jnp
from jax.experimental import pallas as pl
from jax.experimental.pallas import tpu as pltpu


def mha_kernel(q_ref, k_ref, v_ref, wq_ref, wk_ref, wv_ref, wfc_ref,
               gamma_ref, beta_ref, out_ref, attn_ref, o_scratch,
               *, n_head, d_k, d_v):
    # q_ref: (1, TQ, Dm) tile of queries for (batch b, q-tile qt).
    # k_ref/v_ref: (1, Lk, Dm) full key/value sequence for batch b.
    q2d = q_ref[0]                      # (TQ, Dm), input dtype
    k2d = k_ref[0]                      # (Lk, Dm)
    v2d = v_ref[0]                      # (Lv, Dm)

    # Full-width projections — one MXU pass each, f32 accumulation.
    # w_q is pre-scaled by 1/sqrt(d_k) in the wrapper.
    q_all = jnp.dot(q2d, wq_ref[...], preferred_element_type=jnp.float32)  # (TQ, H*dk)
    k_all = jnp.dot(k2d, wk_ref[...], preferred_element_type=jnp.float32)  # (Lk, H*dk)
    v_all = jnp.dot(v2d, wv_ref[...], preferred_element_type=jnp.float32)  # (Lv, H*dv)

    for h in range(n_head):
        qh = q_all[:, h * d_k:(h + 1) * d_k]
        kh = k_all[:, h * d_k:(h + 1) * d_k]
        vh = v_all[:, h * d_v:(h + 1) * d_v]

        # scores = qh @ kh^T via transposed contraction (no XLU transpose).
        scores = jax.lax.dot_general(
            qh, kh, (((1,), (1,)), ((), ())),
            preferred_element_type=jnp.float32)            # (TQ, Lk)

        # numerically-stable softmax over keys; normalize with a multiply.
        m = jnp.max(scores, axis=-1, keepdims=True)
        e = jnp.exp(scores - m)
        inv = 1.0 / jnp.sum(e, axis=-1, keepdims=True)
        p = e * inv

        attn_ref[0, h, :, :] = p.astype(attn_ref.dtype)

        # P @ V in the input dtype (bf16 fast path when inputs are bf16).
        oh = jnp.dot(p.astype(v2d.dtype), vh.astype(v2d.dtype),
                     preferred_element_type=jnp.float32)   # (TQ, dv)
        o_scratch[:, h * d_v:(h + 1) * d_v] = oh

    # Single output projection with full contraction depth K = n_head*d_v.
    proj = jnp.dot(o_scratch[...].astype(wfc_ref.dtype), wfc_ref[...],
                   preferred_element_type=jnp.float32)     # (TQ, Dm)

    # residual + LayerNorm (eps=1e-6, biased variance, like torch.nn.LayerNorm)
    x = proj + q2d.astype(jnp.float32)
    mean = jnp.mean(x, axis=-1, keepdims=True)
    var = jnp.mean((x - mean) ** 2, axis=-1, keepdims=True)
    y = (x - mean) * jax.lax.rsqrt(var + 1e-6)
    y = y * gamma_ref[...].astype(jnp.float32) + beta_ref[...].astype(jnp.float32)

    out_ref[0] = y.astype(out_ref.dtype)


def _pick_tq(lq):
    """Largest q-tile from a small menu that divides Lq; else whole Lq."""
    for t in (512, 256, 128):
        if lq % t == 0:
            return t
    return lq


def multi_head_attention(q, k, v, params, *, n_head, d_k, d_v):
    """q, k, v: [B, L, d_model].  Returns (out [B, Lq, d_model],
    attn [B, n_head, Lq, Lk])."""
    B, Lq, Dm = q.shape
    Lk = k.shape[1]
    Lv = v.shape[1]
    assert Lk == Lv

    wq, wk, wv, wfc, gamma, beta = (
        params["wq"], params["wk"], params["wv"],
        params["wfc"], params["gamma"], params["beta"])

    # Fold 1/temperature into the query projection weight (one scale, once).
    temperature = float(d_k) ** 0.5
    wq_scaled = wq * (1.0 / temperature)

    TQ = _pick_tq(Lq)
    n_qt = Lq // TQ

    kernel = functools.partial(mha_kernel, n_head=n_head, d_k=d_k, d_v=d_v)

    out_shape = (
        jax.ShapeDtypeStruct((B, Lq, Dm), q.dtype),
        jax.ShapeDtypeStruct((B, n_head, Lq, Lk), jnp.float32),
    )

    grid_spec = pltpu.PrefetchScalarGridSpec(
        num_scalar_prefetch=0,
        grid=(B, n_qt),
        in_specs=[
            pl.BlockSpec((1, TQ, Dm), lambda b, qt: (b, qt, 0)),
            pl.BlockSpec((1, Lk, Dm), lambda b, qt: (b, 0, 0)),
            pl.BlockSpec((1, Lv, Dm), lambda b, qt: (b, 0, 0)),
            pl.BlockSpec(wq_scaled.shape, lambda b, qt: (0, 0)),
            pl.BlockSpec(wk.shape, lambda b, qt: (0, 0)),
            pl.BlockSpec(wv.shape, lambda b, qt: (0, 0)),
            pl.BlockSpec(wfc.shape, lambda b, qt: (0, 0)),
            pl.BlockSpec(gamma.shape, lambda b, qt: (0, 0)),
            pl.BlockSpec(beta.shape, lambda b, qt: (0, 0)),
        ],
        out_specs=[
            pl.BlockSpec((1, TQ, Dm), lambda b, qt: (b, qt, 0)),
            pl.BlockSpec((1, n_head, TQ, Lk), lambda b, qt: (b, 0, qt, 0)),
        ],
        scratch_shapes=[pltpu.VMEM((TQ, n_head * d_v), jnp.float32)],
    )

    elt = q.dtype.itemsize
    flops = 2 * B * (
        Lq * Dm * n_head * d_k          # Q projection
        + Lk * Dm * n_head * d_k        # K projection
        + Lv * Dm * n_head * d_v        # V projection
        + n_head * Lq * Lk * d_k        # QK^T
        + n_head * Lq * Lk * d_v        # PV
        + Lq * n_head * d_v * Dm)       # output projection
    bytes_accessed = (
        B * (Lq + Lk + Lv) * Dm * elt                       # q, k, v reads
        + (2 * Dm * n_head * d_k + 2 * Dm * n_head * d_v) * 4  # weights
        + B * Lq * Dm * elt                                  # out write
        + B * n_head * Lq * Lk * 4)                          # attn writeback
    cost = pl.CostEstimate(flops=flops,
                           transcendentals=B * n_head * Lq * Lk,
                           bytes_accessed=bytes_accessed)

    return pl.pallas_call(
        kernel,
        out_shape=out_shape,
        grid_spec=grid_spec,
        compiler_params=pltpu.CompilerParams(
            dimension_semantics=("parallel", "parallel"),
            vmem_limit_bytes=64 * 1024 * 1024),
        cost_estimate=cost,
    )(q, k, v, wq_scaled, wk, wv, wfc, gamma, beta)


def reference_mha(q, k, v, params, *, n_head, d_k, d_v):
    """Pure-JAX reference mirroring the PyTorch module (eval mode)."""
    B, Lq, Dm = q.shape
    Lk = k.shape[1]
    qf = q.astype(jnp.float32)
    kf = k.astype(jnp.float32)
    vf = v.astype(jnp.float32)
    Q = (qf @ params["wq"]).reshape(B, Lq, n_head, d_k).transpose(0, 2, 1, 3)
    K = (kf @ params["wk"]).reshape(B, Lk, n_head, d_k).transpose(0, 2, 1, 3)
    V = (vf @ params["wv"]).reshape(B, Lk, n_head, d_v).transpose(0, 2, 1, 3)
    scores = jnp.einsum("bhqd,bhkd->bhqk", Q / (d_k ** 0.5), K)
    attn = jax.nn.softmax(scores, axis=-1)
    O = jnp.einsum("bhqk,bhkd->bhqd", attn, V)
    O = O.transpose(0, 2, 1, 3).reshape(B, Lq, n_head * d_v)
    proj = O @ params["wfc"]
    x = proj + qf
    mean = jnp.mean(x, axis=-1, keepdims=True)
    var = jnp.mean((x - mean) ** 2, axis=-1, keepdims=True)
    y = (x - mean) / jnp.sqrt(var + 1e-6)
    y = y * params["gamma"][0] + params["beta"][0]
    return y, attn


if __name__ == "__main__":
    # Small shapes consistent with the module's forward.
    B, L, d_model = 2, 8, 32
    n_head, d_k, d_v = 4, 8, 8

    key = jax.random.PRNGKey(0)
    k0, k1, k2, k3, k4, k5, k6 = jax.random.split(key, 7)

    q = jax.random.normal(k0, (B, L, d_model), dtype=jnp.float32)
    k = jax.random.normal(k1, (B, L, d_model), dtype=jnp.float32)
    v = jax.random.normal(k2, (B, L, d_model), dtype=jnp.float32)

    # Weights stored [in, out] (transpose of nn.Linear.weight) so the kernel
    # computes x @ W directly.
    params = {
        "wq":    0.1 * jax.random.normal(k3, (d_model, n_head * d_k), jnp.float32),
        "wk":    0.1 * jax.random.normal(k4, (d_model, n_head * d_k), jnp.float32),
        "wv":    0.1 * jax.random.normal(k5, (d_model, n_head * d_v), jnp.float32),
        "wfc":   0.1 * jax.random.normal(k6, (n_head * d_v, d_model), jnp.float32),
        "gamma": jnp.ones((1, d_model), jnp.float32),   # LayerNorm weight
        "beta":  jnp.zeros((1, d_model), jnp.float32),  # LayerNorm bias
    }

    out, attn = multi_head_attention(q, k, v, params,
                                     n_head=n_head, d_k=d_k, d_v=d_v)
    out = jax.block_until_ready(out)
    attn = jax.block_until_ready(attn)

    ref_out, ref_attn = reference_mha(q, k, v, params,
                                      n_head=n_head, d_k=d_k, d_v=d_v)

    assert out.shape == (B, L, d_model)
    assert attn.shape == (B, n_head, L, L)
    assert jnp.allclose(out, ref_out, atol=1e-4, rtol=1e-4)
    assert jnp.allclose(attn, ref_attn, atol=1e-4, rtol=1e-4)

    print("KERNEL_OK")
</pallas_src>

<mosaic_0001>
module attributes {stable_mosaic.version = 11 : i64} {
  func.func @mha_kernel(%arg0: i32, %arg1: i32, %arg2: memref<1x8x32xf32, #tpu.memory_space<vmem>>, %arg3: memref<1x8x32xf32, #tpu.memory_space<vmem>>, %arg4: memref<1x8x32xf32, #tpu.memory_space<vmem>>, %arg5: memref<32x32xf32, #tpu.memory_space<vmem>>, %arg6: memref<32x32xf32, #tpu.memory_space<vmem>>, %arg7: memref<32x32xf32, #tpu.memory_space<vmem>>, %arg8: memref<32x32xf32, #tpu.memory_space<vmem>>, %arg9: memref<1x32xf32, #tpu.memory_space<vmem>>, %arg10: memref<1x32xf32, #tpu.memory_space<vmem>>, %arg11: memref<1x8x32xf32, #tpu.memory_space<vmem>>, %arg12: memref<1x4x8x8xf32, #tpu.memory_space<vmem>>, %arg13: memref<8x32xf32, #tpu.memory_space<vmem>>) attributes {dimension_semantics = [#tpu.dimension_semantics<parallel>, #tpu.dimension_semantics<parallel>], iteration_bounds = array<i64: 2, 1>, scalar_prefetch = 0 : i64, scratch_operands = 1 : i64, tpu.core_type = #tpu.core_type<tc>, window_params = [{transform_indices = @transform_0, window_bounds = array<i64: 1, 8, 32>}, {transform_indices = @transform_1, window_bounds = array<i64: 1, 8, 32>}, {transform_indices = @transform_2, window_bounds = array<i64: 1, 8, 32>}, {pipeline_mode = #tpu.pipeline_mode<synchronous>, transform_indices = @transform_3, window_bounds = array<i64: 32, 32>}, {pipeline_mode = #tpu.pipeline_mode<synchronous>, transform_indices = @transform_4, window_bounds = array<i64: 32, 32>}, {pipeline_mode = #tpu.pipeline_mode<synchronous>, transform_indices = @transform_5, window_bounds = array<i64: 32, 32>}, {pipeline_mode = #tpu.pipeline_mode<synchronous>, transform_indices = @transform_6, window_bounds = array<i64: 32, 32>}, {pipeline_mode = #tpu.pipeline_mode<synchronous>, transform_indices = @transform_7, window_bounds = array<i64: 1, 32>}, {pipeline_mode = #tpu.pipeline_mode<synchronous>, transform_indices = @transform_8, window_bounds = array<i64: 1, 32>}, {transform_indices = @transform_9, window_bounds = array<i64: 1, 8, 32>}, {transform_indices = @transform_10, window_bounds = array<i64: 1, 4, 8, 8>}]} {
    %c0 = arith.constant 0 : index
    %c0_0 = arith.constant 0 : index
    %c0_1 = arith.constant 0 : index
    %0 = vector.load %arg2[%c0, %c0_0, %c0_1] : memref<1x8x32xf32, #tpu.memory_space<vmem>>, vector<1x8x32xf32>
    %1 = vector.shape_cast %0 : vector<1x8x32xf32> to vector<8x32xf32>
    %c0_2 = arith.constant 0 : index
    %c0_3 = arith.constant 0 : index
    %c0_4 = arith.constant 0 : index
    %2 = vector.load %arg3[%c0_2, %c0_3, %c0_4] : memref<1x8x32xf32, #tpu.memory_space<vmem>>, vector<1x8x32xf32>
    %3 = vector.shape_cast %2 : vector<1x8x32xf32> to vector<8x32xf32>
    %c0_5 = arith.constant 0 : index
    %c0_6 = arith.constant 0 : index
    %c0_7 = arith.constant 0 : index
    %4 = vector.load %arg4[%c0_5, %c0_6, %c0_7] : memref<1x8x32xf32, #tpu.memory_space<vmem>>, vector<1x8x32xf32>
    %5 = vector.shape_cast %4 : vector<1x8x32xf32> to vector<8x32xf32>
    %c0_8 = arith.constant 0 : index
    %c0_9 = arith.constant 0 : index
    %6 = vector.load %arg5[%c0_8, %c0_9] : memref<32x32xf32, #tpu.memory_space<vmem>>, vector<32x32xf32>
    %cst = arith.constant dense<0.000000e+00> : vector<8x32xf32>
    %7 = tpu.matmul %1, %6, %cst {dimension_numbers = #tpu.dot_dimension_numbers<[1], [0], [0], [1], [0, 0, 1, 1], [], []>} : vector<8x32xf32>, vector<32x32xf32>, vector<8x32xf32> -> vector<8x32xf32>
    %c0_10 = arith.constant 0 : index
    %c0_11 = arith.constant 0 : index
    %8 = vector.load %arg6[%c0_10, %c0_11] : memref<32x32xf32, #tpu.memory_space<vmem>>, vector<32x32xf32>
    %cst_12 = arith.constant dense<0.000000e+00> : vector<8x32xf32>
    %9 = tpu.matmul %3, %8, %cst_12 {dimension_numbers = #tpu.dot_dimension_numbers<[1], [0], [0], [1], [0, 0, 1, 1], [], []>} : vector<8x32xf32>, vector<32x32xf32>, vector<8x32xf32> -> vector<8x32xf32>
    %c0_13 = arith.constant 0 : index
    %c0_14 = arith.constant 0 : index
    %10 = vector.load %arg7[%c0_13, %c0_14] : memref<32x32xf32, #tpu.memory_space<vmem>>, vector<32x32xf32>
    %cst_15 = arith.constant dense<0.000000e+00> : vector<8x32xf32>
    %11 = tpu.matmul %5, %10, %cst_15 {dimension_numbers = #tpu.dot_dimension_numbers<[1], [0], [0], [1], [0, 0, 1, 1], [], []>} : vector<8x32xf32>, vector<32x32xf32>, vector<8x32xf32> -> vector<8x32xf32>
    %12 = vector.extract_strided_slice %7 {offsets = [0, 0], sizes = [8, 8], strides = [1, 1]} : vector<8x32xf32> to vector<8x8xf32>
    %13 = vector.extract_strided_slice %9 {offsets = [0, 0], sizes = [8, 8], strides = [1, 1]} : vector<8x32xf32> to vector<8x8xf32>
    %14 = vector.extract_strided_slice %11 {offsets = [0, 0], sizes = [8, 8], strides = [1, 1]} : vector<8x32xf32> to vector<8x8xf32>
    %cst_16 = arith.constant dense<0.000000e+00> : vector<8x8xf32>
    %15 = tpu.matmul %12, %13, %cst_16 {dimension_numbers = #tpu.dot_dimension_numbers<[1], [1], [0], [0], [0, 0, 1, 0], [], []>} : vector<8x8xf32>, vector<8x8xf32>, vector<8x8xf32> -> vector<8x8xf32>
    %cst_17 = arith.constant dense<0xFF800000> : vector<8xf32>
    %16 = vector.multi_reduction <maximumf>, %15, %cst_17 [1] : vector<8x8xf32> to vector<8xf32>
    %17 = vector.shape_cast %16 : vector<8xf32> to vector<8x1xf32>
    %18 = vector.broadcast %17 : vector<8x1xf32> to vector<8x8xf32>
    %19 = arith.subf %15, %18 : vector<8x8xf32>
    %20 = math.exp %19 : vector<8x8xf32>
    %cst_18 = arith.constant dense<0.000000e+00> : vector<8xf32>
    %21 = vector.multi_reduction <add>, %20, %cst_18 [1] : vector<8x8xf32> to vector<8xf32>
    %22 = vector.shape_cast %21 : vector<8xf32> to vector<8x1xf32>
    %cst_19 = arith.constant 1.000000e+00 : f32
    %23 = vector.broadcast %cst_19 : f32 to vector<8x1xf32>
    %24 = arith.divf %23, %22 : vector<8x1xf32>
    %25 = vector.broadcast %24 : vector<8x1xf32> to vector<8x8xf32>
    %26 = arith.mulf %20, %25 : vector<8x8xf32>
    %c0_20 = arith.constant 0 : index
    %c0_21 = arith.constant 0 : index
    %c0_22 = arith.constant 0 : index
    %c0_23 = arith.constant 0 : index
    %27 = vector.load %arg12[%c0_20, %c0_21, %c0_22, %c0_23] : memref<1x4x8x8xf32, #tpu.memory_space<vmem>>, vector<1x1x8x8xf32>
    %28 = vector.shape_cast %27 : vector<1x1x8x8xf32> to vector<8x8xf32>
    %29 = vector.shape_cast %26 : vector<8x8xf32> to vector<1x1x8x8xf32>
    tpu.vector_store %arg12[%c0_20, %c0_21, %c0_22, %c0_23], %29 {strides = array<i32>} : memref<1x4x8x8xf32, #tpu.memory_space<vmem>>, vector<1x1x8x8xf32>,
    %cst_24 = arith.constant dense<0.000000e+00> : vector<8x8xf32>
    %30 = tpu.matmul %26, %14, %cst_24 {dimension_numbers = #tpu.dot_dimension_numbers<[1], [0], [0], [1], [0, 0, 1, 1], [], []>} : vector<8x8xf32>, vector<8x8xf32>, vector<8x8xf32> -> vector<8x8xf32>
    %c0_25 = arith.constant 0 : index
    %c0_26 = arith.constant 0 : index
    %31 = vector.load %arg13[%c0_25, %c0_26] : memref<8x32xf32, #tpu.memory_space<vmem>>, vector<8x8xf32>
    tpu.vector_store %arg13[%c0_25, %c0_26], %30 {strides = array<i32>} : memref<8x32xf32, #tpu.memory_space<vmem>>, vector<8x8xf32>,
    %32 = vector.extract_strided_slice %7 {offsets = [0, 8], sizes = [8, 8], strides = [1, 1]} : vector<8x32xf32> to vector<8x8xf32>
    %33 = vector.extract_strided_slice %9 {offsets = [0, 8], sizes = [8, 8], strides = [1, 1]} : vector<8x32xf32> to vector<8x8xf32>
    %34 = vector.extract_strided_slice %11 {offsets = [0, 8], sizes = [8, 8], strides = [1, 1]} : vector<8x32xf32> to vector<8x8xf32>
    %cst_27 = arith.constant dense<0.000000e+00> : vector<8x8xf32>
    %35 = tpu.matmul %32, %33, %cst_27 {dimension_numbers = #tpu.dot_dimension_numbers<[1], [1], [0], [0], [0, 0, 1, 0], [], []>} : vector<8x8xf32>, vector<8x8xf32>, vector<8x8xf32> -> vector<8x8xf32>
    %cst_28 = arith.constant dense<0xFF800000> : vector<8xf32>
    %36 = vector.multi_reduction <maximumf>, %35, %cst_28 [1] : vector<8x8xf32> to vector<8xf32>
    %37 = vector.shape_cast %36 : vector<8xf32> to vector<8x1xf32>
    %38 = vector.broadcast %37 : vector<8x1xf32> to vector<8x8xf32>
    %39 = arith.subf %35, %38 : vector<8x8xf32>
    %40 = math.exp %39 : vector<8x8xf32>
    %cst_29 = arith.constant dense<0.000000e+00> : vector<8xf32>
    %41 = vector.multi_reduction <add>, %40, %cst_29 [1] : vector<8x8xf32> to vector<8xf32>
    %42 = vector.shape_cast %41 : vector<8xf32> to vector<8x1xf32>
    %cst_30 = arith.constant 1.000000e+00 : f32
    %43 = vector.broadcast %cst_30 : f32 to vector<8x1xf32>
    %44 = arith.divf %43, %42 : vector<8x1xf32>
    %45 = vector.broadcast %44 : vector<8x1xf32> to vector<8x8xf32>
    %46 = arith.mulf %40, %45 : vector<8x8xf32>
    %c0_31 = arith.constant 0 : index
    %c1 = arith.constant 1 : index
    %c0_32 = arith.constant 0 : index
    %c0_33 = arith.constant 0 : index
    %47 = vector.load %arg12[%c0_31, %c1, %c0_32, %c0_33] : memref<1x4x8x8xf32, #tpu.memory_space<vmem>>, vector<1x1x8x8xf32>
    %48 = vector.shape_cast %47 : vector<1x1x8x8xf32> to vector<8x8xf32>
    %49 = vector.shape_cast %46 : vector<8x8xf32> to vector<1x1x8x8xf32>
    tpu.vector_store %arg12[%c0_31, %c1, %c0_32, %c0_33], %49 {strides = array<i32>} : memref<1x4x8x8xf32, #tpu.memory_space<vmem>>, vector<1x1x8x8xf32>,
    %cst_34 = arith.constant dense<0.000000e+00> : vector<8x8xf32>
    %50 = tpu.matmul %46, %34, %cst_34 {dimension_numbers = #tpu.dot_dimension_numbers<[1], [0], [0], [1], [0, 0, 1, 1], [], []>} : vector<8x8xf32>, vector<8x8xf32>, vector<8x8xf32> -> vector<8x8xf32>
    %c0_35 = arith.constant 0 : index
    %c8 = arith.constant 8 : index
    %51 = vector.load %arg13[%c0_35, %c8] : memref<8x32xf32, #tpu.memory_space<vmem>>, vector<8x8xf32>
    tpu.vector_store %arg13[%c0_35, %c8], %50 {strides = array<i32>} : memref<8x32xf32, #tpu.memory_space<vmem>>, vector<8x8xf32>,
    %52 = vector.extract_strided_slice %7 {offsets = [0, 16], sizes = [8, 8], strides = [1, 1]} : vector<8x32xf32> to vector<8x8xf32>
    %53 = vector.extract_strided_slice %9 {offsets = [0, 16], sizes = [8, 8], strides = [1, 1]} : vector<8x32xf32> to vector<8x8xf32>
    %54 = vector.extract_strided_slice %11 {offsets = [0, 16], sizes = [8, 8], strides = [1, 1]} : vector<8x32xf32> to vector<8x8xf32>
    %cst_36 = arith.constant dense<0.000000e+00> : vector<8x8xf32>
    %55 = tpu.matmul %52, %53, %cst_36 {dimension_numbers = #tpu.dot_dimension_numbers<[1], [1], [0], [0], [0, 0, 1, 0], [], []>} : vector<8x8xf32>, vector<8x8xf32>, vector<8x8xf32> -> vector<8x8xf32>
    %cst_37 = arith.constant dense<0xFF800000> : vector<8xf32>
    %56 = vector.multi_reduction <maximumf>, %55, %cst_37 [1] : vector<8x8xf32> to vector<8xf32>
    %57 = vector.shape_cast %56 : vector<8xf32> to vector<8x1xf32>
    %58 = vector.broadcast %57 : vector<8x1xf32> to vector<8x8xf32>
    %59 = arith.subf %55, %58 : vector<8x8xf32>
    %60 = math.exp %59 : vector<8x8xf32>
    %cst_38 = arith.constant dense<0.000000e+00> : vector<8xf32>
    %61 = vector.multi_reduction <add>, %60, %cst_38 [1] : vector<8x8xf32> to vector<8xf32>
    %62 = vector.shape_cast %61 : vector<8xf32> to vector<8x1xf32>
    %cst_39 = arith.constant 1.000000e+00 : f32
    %63 = vector.broadcast %cst_39 : f32 to vector<8x1xf32>
    %64 = arith.divf %63, %62 : vector<8x1xf32>
    %65 = vector.broadcast %64 : vector<8x1xf32> to vector<8x8xf32>
    %66 = arith.mulf %60, %65 : vector<8x8xf32>
    %c0_40 = arith.constant 0 : index
    %c2 = arith.constant 2 : index
    %c0_41 = arith.constant 0 : index
    %c0_42 = arith.constant 0 : index
    %67 = vector.load %arg12[%c0_40, %c2, %c0_41, %c0_42] : memref<1x4x8x8xf32, #tpu.memory_space<vmem>>, vector<1x1x8x8xf32>
    %68 = vector.shape_cast %67 : vector<1x1x8x8xf32> to vector<8x8xf32>
    %69 = vector.shape_cast %66 : vector<8x8xf32> to vector<1x1x8x8xf32>
    tpu.vector_store %arg12[%c0_40, %c2, %c0_41, %c0_42], %69 {strides = array<i32>} : memref<1x4x8x8xf32, #tpu.memory_space<vmem>>, vector<1x1x8x8xf32>,
    %cst_43 = arith.constant dense<0.000000e+00> : vector<8x8xf32>
    %70 = tpu.matmul %66, %54, %cst_43 {dimension_numbers = #tpu.dot_dimension_numbers<[1], [0], [0], [1], [0, 0, 1, 1], [], []>} : vector<8x8xf32>, vector<8x8xf32>, vector<8x8xf32> -> vector<8x8xf32>
    %c0_44 = arith.constant 0 : index
    %c16 = arith.constant 16 : index
    %71 = vector.load %arg13[%c0_44, %c16] : memref<8x32xf32, #tpu.memory_space<vmem>>, vector<8x8xf32>
    tpu.vector_store %arg13[%c0_44, %c16], %70 {strides = array<i32>} : memref<8x32xf32, #tpu.memory_space<vmem>>, vector<8x8xf32>,
    %72 = vector.extract_strided_slice %7 {offsets = [0, 24], sizes = [8, 8], strides = [1, 1]} : vector<8x32xf32> to vector<8x8xf32>
    %73 = vector.extract_strided_slice %9 {offsets = [0, 24], sizes = [8, 8], strides = [1, 1]} : vector<8x32xf32> to vector<8x8xf32>
    %74 = vector.extract_strided_slice %11 {offsets = [0, 24], sizes = [8, 8], strides = [1, 1]} : vector<8x32xf32> to vector<8x8xf32>
    %cst_45 = arith.constant dense<0.000000e+00> : vector<8x8xf32>
    %75 = tpu.matmul %72, %73, %cst_45 {dimension_numbers = #tpu.dot_dimension_numbers<[1], [1], [0], [0], [0, 0, 1, 0], [], []>} : vector<8x8xf32>, vector<8x8xf32>, vector<8x8xf32> -> vector<8x8xf32>
    %cst_46 = arith.constant dense<0xFF800000> : vector<8xf32>
    %76 = vector.multi_reduction <maximumf>, %75, %cst_46 [1] : vector<8x8xf32> to vector<8xf32>
    %77 = vector.shape_cast %76 : vector<8xf32> to vector<8x1xf32>
    %78 = vector.broadcast %77 : vector<8x1xf32> to vector<8x8xf32>
    %79 = arith.subf %75, %78 : vector<8x8xf32>
    %80 = math.exp %79 : vector<8x8xf32>
    %cst_47 = arith.constant dense<0.000000e+00> : vector<8xf32>
    %81 = vector.multi_reduction <add>, %80, %cst_47 [1] : vector<8x8xf32> to vector<8xf32>
    %82 = vector.shape_cast %81 : vector<8xf32> to vector<8x1xf32>
    %cst_48 = arith.constant 1.000000e+00 : f32
    %83 = vector.broadcast %cst_48 : f32 to vector<8x1xf32>
    %84 = arith.divf %83, %82 : vector<8x1xf32>
    %85 = vector.broadcast %84 : vector<8x1xf32> to vector<8x8xf32>
    %86 = arith.mulf %80, %85 : vector<8x8xf32>
    %c0_49 = arith.constant 0 : index
    %c3 = arith.constant 3 : index
    %c0_50 = arith.constant 0 : index
    %c0_51 = arith.constant 0 : index
    %87 = vector.load %arg12[%c0_49, %c3, %c0_50, %c0_51] : memref<1x4x8x8xf32, #tpu.memory_space<vmem>>, vector<1x1x8x8xf32>
    %88 = vector.shape_cast %87 : vector<1x1x8x8xf32> to vector<8x8xf32>
    %89 = vector.shape_cast %86 : vector<8x8xf32> to vector<1x1x8x8xf32>
    tpu.vector_store %arg12[%c0_49, %c3, %c0_50, %c0_51], %89 {strides = array<i32>} : memref<1x4x8x8xf32, #tpu.memory_space<vmem>>, vector<1x1x8x8xf32>,
    %cst_52 = arith.constant dense<0.000000e+00> : vector<8x8xf32>
    %90 = tpu.matmul %86, %74, %cst_52 {dimension_numbers = #tpu.dot_dimension_numbers<[1], [0], [0], [1], [0, 0, 1, 1], [], []>} : vector<8x8xf32>, vector<8x8xf32>, vector<8x8xf32> -> vector<8x8xf32>
    %c0_53 = arith.constant 0 : index
    %c24 = arith.constant 24 : index
    %91 = vector.load %arg13[%c0_53, %c24] : memref<8x32xf32, #tpu.memory_space<vmem>>, vector<8x8xf32>
    tpu.vector_store %arg13[%c0_53, %c24], %90 {strides = array<i32>} : memref<8x32xf32, #tpu.memory_space<vmem>>, vector<8x8xf32>,
    %c0_54 = arith.constant 0 : index
    %c0_55 = arith.constant 0 : index
    %92 = vector.load %arg13[%c0_54, %c0_55] : memref<8x32xf32, #tpu.memory_space<vmem>>, vector<8x32xf32>
    %c0_56 = arith.constant 0 : index
    %c0_57 = arith.constant 0 : index
    %93 = vector.load %arg8[%c0_56, %c0_57] : memref<32x32xf32, #tpu.memory_space<vmem>>, vector<32x32xf32>
    %cst_58 = arith.constant dense<0.000000e+00> : vector<8x32xf32>
    %94 = tpu.matmul %92, %93, %cst_58 {dimension_numbers = #tpu.dot_dimension_numbers<[1], [0], [0], [1], [0, 0, 1, 1], [], []>} : vector<8x32xf32>, vector<32x32xf32>, vector<8x32xf32> -> vector<8x32xf32>
    %95 = arith.addf %94, %1 : vector<8x32xf32>
    %cst_59 = arith.constant dense<0.000000e+00> : vector<8xf32>
    %96 = vector.multi_reduction <add>, %95, %cst_59 [1] : vector<8x32xf32> to vector<8xf32>
    %97 = vector.shape_cast %96 : vector<8xf32> to vector<8x1xf32>
    %cst_60 = arith.constant 3.200000e+01 : f32
    %98 = vector.broadcast %cst_60 : f32 to vector<8x1xf32>
    %99 = arith.divf %97, %98 : vector<8x1xf32>
    %100 = vector.broadcast %99 : vector<8x1xf32> to vector<8x32xf32>
    %101 = arith.subf %95, %100 : vector<8x32xf32>
    %102 = arith.mulf %101, %101 : vector<8x32xf32>
    %cst_61 = arith.constant dense<0.000000e+00> : vector<8xf32>
    %103 = vector.multi_reduction <add>, %102, %cst_61 [1] : vector<8x32xf32> to vector<8xf32>
    %104 = vector.shape_cast %103 : vector<8xf32> to vector<8x1xf32>
    %cst_62 = arith.constant 3.200000e+01 : f32
    %105 = vector.broadcast %cst_62 : f32 to vector<8x1xf32>
    %106 = arith.divf %104, %105 : vector<8x1xf32>
    %107 = vector.broadcast %99 : vector<8x1xf32> to vector<8x32xf32>
    %108 = arith.subf %95, %107 : vector<8x32xf32>
    %cst_63 = arith.constant 9.99999997E-7 : f32
    %109 = vector.broadcast %cst_63 : f32 to vector<8x1xf32>
    %110 = arith.addf %106, %109 : vector<8x1xf32>
    %111 = math.rsqrt %110 : vector<8x1xf32>
    %112 = vector.broadcast %111 : vector<8x1xf32> to vector<8x32xf32>
    %113 = arith.mulf %108, %112 : vector<8x32xf32>
    %c0_64 = arith.constant 0 : index
    %c0_65 = arith.constant 0 : index
    %114 = vector.load %arg9[%c0_64, %c0_65] : memref<1x32xf32, #tpu.memory_space<vmem>>, vector<1x32xf32>
    %115 = vector.broadcast %114 : vector<1x32xf32> to vector<8x32xf32>
    %116 = arith.mulf %113, %115 : vector<8x32xf32>
    %c0_66 = arith.constant 0 : index
    %c0_67 = arith.constant 0 : index
    %117 = vector.load %arg10[%c0_66, %c0_67] : memref<1x32xf32, #tpu.memory_space<vmem>>, vector<1x32xf32>
    %118 = vector.broadcast %117 : vector<1x32xf32> to vector<8x32xf32>
    %119 = arith.addf %116, %118 : vector<8x32xf32>
    %c0_68 = arith.constant 0 : index
    %c0_69 = arith.constant 0 : index
    %c0_70 = arith.constant 0 : index
    %120 = vector.load %arg11[%c0_68, %c0_69, %c0_70] : memref<1x8x32xf32, #tpu.memory_space<vmem>>, vector<1x8x32xf32>
    %121 = vector.shape_cast %120 : vector<1x8x32xf32> to vector<8x32xf32>
    %122 = vector.shape_cast %119 : vector<8x32xf32> to vector<1x8x32xf32>
    tpu.vector_store %arg11[%c0_68, %c0_69, %c0_70], %122 {strides = array<i32>} : memref<1x8x32xf32, #tpu.memory_space<vmem>>, vector<1x8x32xf32>,
    return
  }
  func.func @transform_0(%arg0: i32, %arg1: i32) -> (i32, i32, i32) {
    %c0_i32 = arith.constant 0 : i32
    %c0_i32_0 = arith.constant 0 : i32
    return %arg0, %arg1, %c0_i32 : i32, i32, i32
  }
  func.func @transform_1(%arg0: i32, %arg1: i32) -> (i32, i32, i32) {
    %c0_i32 = arith.constant 0 : i32
    %c0_i32_0 = arith.constant 0 : i32
    %c0_i32_1 = arith.constant 0 : i32
    return %arg0, %c0_i32, %c0_i32_0 : i32, i32, i32
  }
  func.func @transform_2(%arg0: i32, %arg1: i32) -> (i32, i32, i32) {
    %c0_i32 = arith.constant 0 : i32
    %c0_i32_0 = arith.constant 0 : i32
    %c0_i32_1 = arith.constant 0 : i32
    return %arg0, %c0_i32, %c0_i32_0 : i32, i32, i32
  }
  func.func @transform_3(%arg0: i32, %arg1: i32) -> (i32, i32) {
    %c0_i32 = arith.constant 0 : i32
    %c0_i32_0 = arith.constant 0 : i32
    %c0_i32_1 = arith.constant 0 : i32
    return %c0_i32, %c0_i32_0 : i32, i32
  }
  func.func @transform_4(%arg0: i32, %arg1: i32) -> (i32, i32) {
    %c0_i32 = arith.constant 0 : i32
    %c0_i32_0 = arith.constant 0 : i32
    %c0_i32_1 = arith.constant 0 : i32
    return %c0_i32, %c0_i32_0 : i32, i32
  }
  func.func @transform_5(%arg0: i32, %arg1: i32) -> (i32, i32) {
    %c0_i32 = arith.constant 0 : i32
    %c0_i32_0 = arith.constant 0 : i32
    %c0_i32_1 = arith.constant 0 : i32
    return %c0_i32, %c0_i32_0 : i32, i32
  }
  func.func @transform_6(%arg0: i32, %arg1: i32) -> (i32, i32) {
    %c0_i32 = arith.constant 0 : i32
    %c0_i32_0 = arith.constant 0 : i32
    %c0_i32_1 = arith.constant 0 : i32
    return %c0_i32, %c0_i32_0 : i32, i32
  }
  func.func @transform_7(%arg0: i32, %arg1: i32) -> (i32, i32) {
    %c0_i32 = arith.constant 0 : i32
    %c0_i32_0 = arith.constant 0 : i32
    %c0_i32_1 = arith.constant 0 : i32
    return %c0_i32, %c0_i32_0 : i32, i32
  }
  func.func @transform_8(%arg0: i32, %arg1: i32) -> (i32, i32) {
    %c0_i32 = arith.constant 0 : i32
    %c0_i32_0 = arith.constant 0 : i32
    %c0_i32_1 = arith.constant 0 : i32
    return %c0_i32, %c0_i32_0 : i32, i32
  }
  func.func @transform_9(%arg0: i32, %arg1: i32) -> (i32, i32, i32) {
    %c0_i32 = arith.constant 0 : i32
    %c0_i32_0 = arith.constant 0 : i32
    return %arg0, %arg1, %c0_i32 : i32, i32, i32
  }
  func.func @transform_10(%arg0: i32, %arg1: i32) -> (i32, i32, i32, i32) {
    %c0_i32 = arith.constant 0 : i32
    %c0_i32_0 = arith.constant 0 : i32
    %c0_i32_1 = arith.constant 0 : i32
    return %arg0, %c0_i32, %arg1, %c0_i32_0 : i32, i32, i32, i32
  }
}

</mosaic_0001>

<llo_original>
// kernel: tpu_custom_call.1
$region0: #{tpu_custom_call.1}
  #allocation0 [shape = 'u32[]', space=smem, size = 0x4, offset = 0x4, fixed_abs, tag = 'smem constant byte address 0x4 - core index']
  #allocation1 [shape = 'u32[144,128]{1,0:T(1,128)}', space=vmem, size = 0x12000, scoped, tag = 'internal scratch']
  #allocation2 [shape = 'f32[8,32]{1,0:T(8,128)}', space=vmem, size = 0x1000, scoped, tag = 'scratch operand']
  %s0 = inlined_call_operand.hbm [shape: f32[2,8,32], index: 0, kind: input, shape index: {}]
  %s1 = inlined_call_operand.hbm [shape: f32[2,8,32], index: 1, kind: input, shape index: {}]
  %s2 = inlined_call_operand.hbm [shape: f32[2,8,32], index: 2, kind: input, shape index: {}]
  %s3 = inlined_call_operand.hbm [shape: f32[32,32], index: 3, kind: input, shape index: {}]
  %s4 = inlined_call_operand.hbm [shape: f32[32,32], index: 4, kind: input, shape index: {}]
  %s5 = inlined_call_operand.hbm [shape: f32[32,32], index: 5, kind: input, shape index: {}]
  %s6 = inlined_call_operand.hbm [shape: f32[32,32], index: 6, kind: input, shape index: {}]
  %s7 = inlined_call_operand.hbm [shape: f32[1,32], index: 7, kind: input, shape index: {}]
  %s8 = inlined_call_operand.hbm [shape: f32[1,32], index: 8, kind: input, shape index: {}]
  %s9 = inlined_call_operand.hbm [shape: f32[2,8,32], index: 9, kind: output, shape index: {0}]
  %s10 = inlined_call_operand.hbm [shape: f32[2,4,8,8], index: 10, kind: output, shape index: {1}]
  %11 = xla_tuple %s9, %s10
  %s12 = sld [smem:[#allocation0]]
  $region113: #{tpu_custom_call.1} parent=0
    _
  %s14 = ssub.s32 1, %s12
  %s15 = scalar_select 0, %s14, %s12
  $region1: #{tpu_custom_call.1} parent=0
    #allocation3 [shape = 'u8[8192]{0}', space=vmem, size = 0x2000, scoped, tag = 'input window, operand 0']
    #allocation4 [shape = 's32[2]{0}', space=sflag, size = 0x8, scoped, tag = 'scoped memory for tpu_custom_call.1']
    #allocation5 [shape = 's32[2]{0}', space=sflag, size = 0x8, scoped, tag = 'scoped memory for tpu_custom_call.1']
    #allocation6 [shape = 'u8[8192]{0}', space=vmem, size = 0x2000, scoped, tag = 'input window, operand 1']
    #allocation7 [shape = 's32[2]{0}', space=sflag, size = 0x8, scoped, tag = 'scoped memory for tpu_custom_call.1']
    #allocation8 [shape = 'u8[8192]{0}', space=vmem, size = 0x2000, scoped, tag = 'input window, operand 2']
    #allocation9 [shape = 'u8[16384]{0}', space=vmem, size = 0x4000, scoped, tag = 'input window, operand 3, single buffered']
    #allocation10 [shape = 's32[1]{0}', space=sflag, size = 0x4, scoped, tag = 'scoped memory for tpu_custom_call.1']
    #allocation11 [shape = 'u8[16384]{0}', space=vmem, size = 0x4000, scoped, tag = 'input window, operand 4, single buffered']
    #allocation12 [shape = 'u8[16384]{0}', space=vmem, size = 0x4000, scoped, tag = 'input window, operand 5, single buffered']
    #allocation13 [shape = 's32[1]{0}', space=sflag, size = 0x4, scoped, tag = 'scoped memory for tpu_custom_call.1']
    #allocation14 [shape = 'u8[16384]{0}', space=vmem, size = 0x4000, scoped, tag = 'input window, operand 6, single buffered']
    #allocation15 [shape = 'u8[512]{0}', space=vmem, size = 0x400, scoped, tag = 'input window, operand 7, single buffered']
    #allocation16 [shape = 's32[1]{0}', space=sflag, size = 0x4, scoped, tag = 'scoped memory for tpu_custom_call.1']
    #allocation17 [shape = 'u8[512]{0}', space=vmem, size = 0x400, scoped, tag = 'input window, operand 8, single buffered']
    #allocation18 [shape = 'u8[8192]{0}', space=vmem, size = 0x2000, scoped, tag = 'output window, operand 0']
    #allocation19 [shape = 'u8[32768]{0}', space=vmem, size = 0x8000, scoped, tag = 'output window, operand 1']
    #allocation20 [shape = 's32[2]{0}', space=sflag, size = 0x8, scoped, tag = 'scoped memory for tpu_custom_call.1']
    %16 = vsyncpa [#allocation4], 0
    %s17 = scalar_lea.sflag [#allocation4], 1
    %18 = vsyncpa %s17, 0
    %19 = vsyncpa [#allocation7], 0
    %s20 = scalar_lea.sflag [#allocation7], 1
    %21 = vsyncpa %s20, 0
    %22 = vsyncpa [#allocation10], 0
    %23 = vsyncpa [#allocation13], 0
    %24 = vsyncpa [#allocation16], 0
    %25 = vsyncpa [#allocation5], 0
    %s26 = scalar_lea.sflag [#allocation5], 1
    %27 = vsyncpa %s26, 0
    %28 = vsyncpa [#allocation20], 0
    %s29 = scalar_lea.sflag [#allocation20], 1
    %30 = vsyncpa %s29, 0
    loop: start=0, step=1, limit=4
    $region2: #{tpu_custom_call.1} parent=1 // loop_pre_header
      _
    $region3: #{tpu_custom_call.1} parent=1 // loop_header
      %s32 = sphi 0, %s36
      %p33 = scmp.ge.s32.totalorder %s32, 4
      %s39 = sphi 0, %s51
      %s40 = sphi 0, %s47
      %s41 = sphi 0, %s39
      %s42 = sphi 0, %s40
      %s43 = sphi 0, %s41
      %s44 = sphi 0, %s42
      %s56 = sphi 0, %s58
      %s59 = sphi 0, %s56
      %s60 = sphi 0, %s59
      %s76 = sphi 0, %s60
      %s82 = sphi 0, %s84
      %s85 = sphi 0, %s82
      %s86 = sphi 0, %s85
      %s102 = sphi 0, %s86
      %s108 = sphi 0, %s110
      %s111 = sphi 0, %s108
      %s112 = sphi 0, %s111
      %s128 = sphi 0, %s112
      %s132 = sphi 0, %s132
      %s134 = sphi 0, %s132
      %s135 = sphi 0, %s134
      %s149 = sphi 0, %s135
      %s153 = sphi 0, %s153
      %s155 = sphi 0, %s153
      %s156 = sphi 0, %s155
      %s170 = sphi 0, %s156
      %s174 = sphi 0, %s174
      %s176 = sphi 0, %s174
      %s177 = sphi 0, %s176
      %s191 = sphi 0, %s177
      %s195 = sphi 0, %s195
      %s197 = sphi 0, %s195
      %s198 = sphi 0, %s197
      %s212 = sphi 0, %s198
      %s216 = sphi 0, %s216
      %s218 = sphi 0, %s216
      %s219 = sphi 0, %s218
      %s233 = sphi 0, %s219
      %s237 = sphi 0, %s237
      %s239 = sphi 0, %s237
      %s240 = sphi 0, %s239
      %s254 = sphi 0, %s240
      %s262 = sphi 0, %s264
      %s265 = sphi 0, %s262
      %s266 = sphi 0, %s265
      %s282 = sphi 0, %s266
      %s290 = sphi 0, %s292
      %s293 = sphi 0, %s290
      %s294 = sphi 0, %s293
      %s310 = sphi 0, %s294
    $region4: #{tpu_custom_call.1} parent=1 // loop_header_branch
      %35 = sbr.rel (%p33) target = $region8
    $region5: #{tpu_custom_call.1} parent=1 // loop_body
      %s37 = ssub.s32 %s32, 1
      %s38 = ssub.s32 %s32, 2
      %s45 = sadd.s32 1, %s40
      %p46 = scmp.ge.s32.totalorder %s45, 1
      %s47 = scalar_select %p46, 0, %s45
      %s48 = sadd.s32 1, %s39
      %s49 = scalar_select %p46, %s48, %s39
      %p50 = scmp.ge.s32.totalorder %s49, 2
      %s51 = scalar_select %p50, 0, %s49
      %s52 = ssub.s32 %s39, %s51
      %s53 = ssub.s32 %s40, %s47
      %s54 = sor.u32 %s52, %s53
      %p55 = scmp.eq.s32.totalorder %s54, 0
      %s57 = sadd.s32 %s56, 1
      %s58 = scalar_select %p55, %s56, %s57
      %p61 = pneg %p55
      %p62 = scmp.eq.s32.totalorder %s32, 1
      %p63 = por %p61, %p62
      %p64 = scmp.ne.s32.totalorder %s56, %s59
      %p65 = scmp.eq.s32.totalorder %s32, 0
      %p66 = por %p64, %p65
      %p67 = scmp.ne.s32.totalorder %s56, %s59
      %p68 = scmp.eq.s32.totalorder %s37, 1
      %p69 = por %p67, %p68
      %p70 = scmp.ne.s32.totalorder %s59, %s60
      %p71 = scmp.eq.s32.totalorder %s37, 0
      %p72 = por %p70, %p71
      %p73 = scmp.ne.s32.totalorder %s59, %s60
      %p74 = scmp.eq.s32.totalorder %s38, 1
      %p75 = por %p73, %p74
      %p77 = scmp.ne.s32.totalorder %s60, %s76
      %p78 = scmp.eq.s32.totalorder %s38, 0
      %p79 = por %p77, %p78
      %s80 = ssub.s32 %s39, %s51
      %p81 = scmp.eq.s32.totalorder %s80, 0
      %s83 = sadd.s32 %s82, 1
      %s84 = scalar_select %p81, %s82, %s83
      %p87 = pneg %p81
      %p88 = scmp.eq.s32.totalorder %s32, 1
      %p89 = por %p87, %p88
      %p90 = scmp.ne.s32.totalorder %s82, %s85
      %p91 = scmp.eq.s32.totalorder %s32, 0
      %p92 = por %p90, %p91
      %p93 = scmp.ne.s32.totalorder %s82, %s85
      %p94 = scmp.eq.s32.totalorder %s37, 1
      %p95 = por %p93, %p94
      %p96 = scmp.ne.s32.totalorder %s85, %s86
      %p97 = scmp.eq.s32.totalorder %s37, 0
      %p98 = por %p96, %p97
      %p99 = scmp.ne.s32.totalorder %s85, %s86
      %p100 = scmp.eq.s32.totalorder %s38, 1
      %p101 = por %p99, %p100
      %p103 = scmp.ne.s32.totalorder %s86, %s102
      %p104 = scmp.eq.s32.totalorder %s38, 0
      %p105 = por %p103, %p104
      %s106 = ssub.s32 %s39, %s51
      %p107 = scmp.eq.s32.totalorder %s106, 0
      %s109 = sadd.s32 %s108, 1
      %s110 = scalar_select %p107, %s108, %s109
      %p113 = pneg %p107
      %p114 = scmp.eq.s32.totalorder %s32, 1
      %p115 = por %p113, %p114
      %p116 = scmp.ne.s32.totalorder %s108, %s111
      %p117 = scmp.eq.s32.totalorder %s32, 0
      %p118 = por %p116, %p117
      %p119 = scmp.ne.s32.totalorder %s108, %s111
      %p120 = scmp.eq.s32.totalorder %s37, 1
      %p121 = por %p119, %p120
      %p122 = scmp.ne.s32.totalorder %s111, %s112
      %p123 = scmp.eq.s32.totalorder %s37, 0
      %p124 = por %p122, %p123
      %p125 = scmp.ne.s32.totalorder %s111, %s112
      %p126 = scmp.eq.s32.totalorder %s38, 1
      %p127 = por %p125, %p126
      %p129 = scmp.ne.s32.totalorder %s112, %s128
      %p130 = scmp.eq.s32.totalorder %s38, 0
      %p131 = por %p129, %p130
      %s133 = sadd.s32 %s132, 1
      %p136 = scmp.eq.s32.totalorder %s32, 1
      %p137 = scmp.ne.s32.totalorder %s132, %s134
      %p138 = scmp.eq.s32.totalorder %s32, 0
      %p139 = por %p137, %p138
      %p140 = scmp.ne.s32.totalorder %s132, %s134
      %p141 = scmp.eq.s32.totalorder %s37, 1
      %p142 = por %p140, %p141
      %p143 = scmp.ne.s32.totalorder %s134, %s135
      %p144 = scmp.eq.s32.totalorder %s37, 0
      %p145 = por %p143, %p144
      %p146 = scmp.ne.s32.totalorder %s134, %s135
      %p147 = scmp.eq.s32.totalorder %s38, 1
      %p148 = por %p146, %p147
      %p150 = scmp.ne.s32.totalorder %s135, %s149
      %p151 = scmp.eq.s32.totalorder %s38, 0
      %p152 = por %p150, %p151
      %s154 = sadd.s32 %s153, 1
      %p157 = scmp.eq.s32.totalorder %s32, 1
      %p158 = scmp.ne.s32.totalorder %s153, %s155
      %p159 = scmp.eq.s32.totalorder %s32, 0
      %p160 = por %p158, %p159
      %p161 = scmp.ne.s32.totalorder %s153, %s155
      %p162 = scmp.eq.s32.totalorder %s37, 1
      %p163 = por %p161, %p162
      %p164 = scmp.ne.s32.totalorder %s155, %s156
      %p165 = scmp.eq.s32.totalorder %s37, 0
      %p166 = por %p164, %p165
      %p167 = scmp.ne.s32.totalorder %s155, %s156
      %p168 = scmp.eq.s32.totalorder %s38, 1
      %p169 = por %p167, %p168
      %p171 = scmp.ne.s32.totalorder %s156, %s170
      %p172 = scmp.eq.s32.totalorder %s38, 0
      %p173 = por %p171, %p172
      %s175 = sadd.s32 %s174, 1
      %p178 = scmp.eq.s32.totalorder %s32, 1
      %p179 = scmp.ne.s32.totalorder %s174, %s176
      %p180 = scmp.eq.s32.totalorder %s32, 0
      %p181 = por %p179, %p180
      %p182 = scmp.ne.s32.totalorder %s174, %s176
      %p183 = scmp.eq.s32.totalorder %s37, 1
      %p184 = por %p182, %p183
      %p185 = scmp.ne.s32.totalorder %s176, %s177
      %p186 = scmp.eq.s32.totalorder %s37, 0
      %p187 = por %p185, %p186
      %p188 = scmp.ne.s32.totalorder %s176, %s177
      %p189 = scmp.eq.s32.totalorder %s38, 1
      %p190 = por %p188, %p189
      %p192 = scmp.ne.s32.totalorder %s177, %s191
      %p193 = scmp.eq.s32.totalorder %s38, 0
      %p194 = por %p192, %p193
      %s196 = sadd.s32 %s195, 1
      %p199 = scmp.eq.s32.totalorder %s32, 1
      %p200 = scmp.ne.s32.totalorder %s195, %s197
      %p201 = scmp.eq.s32.totalorder %s32, 0
      %p202 = por %p200, %p201
      %p203 = scmp.ne.s32.totalorder %s195, %s197
      %p204 = scmp.eq.s32.totalorder %s37, 1
      %p205 = por %p203, %p204
      %p206 = scmp.ne.s32.totalorder %s197, %s198
      %p207 = scmp.eq.s32.totalorder %s37, 0
      %p208 = por %p206, %p207
      %p209 = scmp.ne.s32.totalorder %s197, %s198
      %p210 = scmp.eq.s32.totalorder %s38, 1
      %p211 = por %p209, %p210
      %p213 = scmp.ne.s32.totalorder %s198, %s212
      %p214 = scmp.eq.s32.totalorder %s38, 0
      %p215 = por %p213, %p214
      %s217 = sadd.s32 %s216, 1
      %p220 = scmp.eq.s32.totalorder %s32, 1
      %p221 = scmp.ne.s32.totalorder %s216, %s218
      %p222 = scmp.eq.s32.totalorder %s32, 0
      %p223 = por %p221, %p222
      %p224 = scmp.ne.s32.totalorder %s216, %s218
      %p225 = scmp.eq.s32.totalorder %s37, 1
      %p226 = por %p224, %p225
      %p227 = scmp.ne.s32.totalorder %s218, %s219
      %p228 = scmp.eq.s32.totalorder %s37, 0
      %p229 = por %p227, %p228
      %p230 = scmp.ne.s32.totalorder %s218, %s219
      %p231 = scmp.eq.s32.totalorder %s38, 1
      %p232 = por %p230, %p231
      %p234 = scmp.ne.s32.totalorder %s219, %s233
      %p235 = scmp.eq.s32.totalorder %s38, 0
      %p236 = por %p234, %p235
      %s238 = sadd.s32 %s237, 1
      %p241 = scmp.eq.s32.totalorder %s32, 1
      %p242 = scmp.ne.s32.totalorder %s237, %s239
      %p243 = scmp.eq.s32.totalorder %s32, 0
      %p244 = por %p242, %p243
      %p245 = scmp.ne.s32.totalorder %s237, %s239
      %p246 = scmp.eq.s32.totalorder %s37, 1
      %p247 = por %p245, %p246
      %p248 = scmp.ne.s32.totalorder %s239, %s240
      %p249 = scmp.eq.s32.totalorder %s37, 0
      %p250 = por %p248, %p249
      %p251 = scmp.ne.s32.totalorder %s239, %s240
      %p252 = scmp.eq.s32.totalorder %s38, 1
      %p253 = por %p251, %p252
      %p255 = scmp.ne.s32.totalorder %s240, %s254
      %p256 = scmp.eq.s32.totalorder %s38, 0
      %p257 = por %p255, %p256
      %s258 = ssub.s32 %s39, %s51
      %s259 = ssub.s32 %s40, %s47
      %s260 = sor.u32 %s258, %s259
      %p261 = scmp.eq.s32.totalorder %s260, 0
      %s263 = sadd.s32 %s262, 1
      %s264 = scalar_select %p261, %s262, %s263
      %p267 = pneg %p261
      %p268 = scmp.eq.s32.totalorder %s32, 1
      %p269 = por %p267, %p268
      %p270 = scmp.ne.s32.totalorder %s262, %s265
      %p271 = scmp.eq.s32.totalorder %s32, 0
      %p272 = por %p270, %p271
      %p273 = scmp.ne.s32.totalorder %s262, %s265
      %p274 = scmp.eq.s32.totalorder %s37, 1
      %p275 = por %p273, %p274
      %p276 = scmp.ne.s32.totalorder %s265, %s266
      %p277 = scmp.eq.s32.totalorder %s37, 0
      %p278 = por %p276, %p277
      %p279 = scmp.ne.s32.totalorder %s265, %s266
      %p280 = scmp.eq.s32.totalorder %s38, 1
      %p281 = por %p279, %p280
      %p283 = scmp.ne.s32.totalorder %s266, %s282
      %p284 = scmp.eq.s32.totalorder %s38, 0
      %p285 = por %p283, %p284
      %s286 = ssub.s32 %s39, %s51
      %s287 = ssub.s32 %s40, %s47
      %s288 = sor.u32 %s286, %s287
      %p289 = scmp.eq.s32.totalorder %s288, 0
      %s291 = sadd.s32 %s290, 1
      %s292 = scalar_select %p289, %s290, %s291
      %p295 = pneg %p289
      %p296 = scmp.eq.s32.totalorder %s32, 1
      %p297 = por %p295, %p296
      %p298 = scmp.ne.s32.totalorder %s290, %s293
      %p299 = scmp.eq.s32.totalorder %s32, 0
      %p300 = por %p298, %p299
      %p301 = scmp.ne.s32.totalorder %s290, %s293
      %p302 = scmp.eq.s32.totalorder %s37, 1
      %p303 = por %p301, %p302
      %p304 = scmp.ne.s32.totalorder %s293, %s294
      %p305 = scmp.eq.s32.totalorder %s37, 0
      %p306 = por %p304, %p305
      %p307 = scmp.ne.s32.totalorder %s293, %s294
      %p308 = scmp.eq.s32.totalorder %s38, 1
      %p309 = por %p307, %p308
      %p311 = scmp.ne.s32.totalorder %s294, %s310
      %p312 = scmp.eq.s32.totalorder %s38, 0
      %p313 = por %p311, %p312
      %p314 = scmp.le.s32.totalorder 1, %s32
      %p315 = scmp.lt.s32.totalorder %s32, 3
      %p316 = pnand %p314, %p315
      %p317 = pneg %p316
      // Predicated region
      $region9: #{tpu_custom_call.1} parent=5 // pred_check
        _
      $region10: #{tpu_custom_call.1} parent=5 // pred_check_branch
        %319 = sbr.rel (%p316) target = $region12
      $region11: #{tpu_custom_call.1} parent=5 // pred_region
        %s320 = ssub.s32 %s32, 1
        // Predicated region
        $region13: #{tpu_custom_call.1} parent=11 // pred_check
          %p321 = pneg %p145
        $region14: #{tpu_custom_call.1} parent=11 // pred_check_branch
          %323 = sbr.rel (%p321) target = $region16
        $region15: #{tpu_custom_call.1} parent=11 // pred_region
          %s325 = ssub.s32 512, 512
          %326 = vsyncadd [#allocation10], %s325
          %s327 = sshll.u32 [#allocation9], 4
          %s328 = int_to_ptr.vmem [resolvable:$true] %s327
          %333 = dma.hbm_to_vmem [thread:$0]  %s3, 512, %s328, [#allocation10], 128, 128, 8
        $region16: #{tpu_custom_call.1} parent=11 // pred_fallthru
          _
        // Predicated region
        $region17: #{tpu_custom_call.1} parent=11 // pred_check
          %p334 = pneg %p166
        $region18: #{tpu_custom_call.1} parent=11 // pred_check_branch
          %336 = sbr.rel (%p334) target = $region20
        $region19: #{tpu_custom_call.1} parent=11 // pred_region
          %s338 = ssub.s32 512, 512
          %339 = vsyncadd [#allocation10], %s338
          %s340 = sshll.u32 [#allocation11], 4
          %s341 = int_to_ptr.vmem [resolvable:$true] %s340
          %346 = dma.hbm_to_vmem [thread:$0]  %s4, 512, %s341, [#allocation10], 128, 128, 8
        $region20: #{tpu_custom_call.1} parent=11 // pred_fallthru
          _
        // Predicated region
        $region21: #{tpu_custom_call.1} parent=11 // pred_check
          %p347 = pneg %p187
        $region22: #{tpu_custom_call.1} parent=11 // pred_check_branch
          %349 = sbr.rel (%p347) target = $region24
        $region23: #{tpu_custom_call.1} parent=11 // pred_region
          %s351 = ssub.s32 512, 512
          %352 = vsyncadd [#allocation13], %s351
          %s353 = sshll.u32 [#allocation12], 4
          %s354 = int_to_ptr.vmem [resolvable:$true] %s353
          %359 = dma.hbm_to_vmem [thread:$0]  %s5, 512, %s354, [#allocation13], 128, 128, 8
        $region24: #{tpu_custom_call.1} parent=11 // pred_fallthru
          _
        // Predicated region
        $region25: #{tpu_custom_call.1} parent=11 // pred_check
          %p360 = pneg %p208
        $region26: #{tpu_custom_call.1} parent=11 // pred_check_branch
          %362 = sbr.rel (%p360) target = $region28
        $region27: #{tpu_custom_call.1} parent=11 // pred_region
          %s364 = ssub.s32 512, 512
          %365 = vsyncadd [#allocation13], %s364
          %s366 = sshll.u32 [#allocation14], 4
          %s367 = int_to_ptr.vmem [resolvable:$true] %s366
          %372 = dma.hbm_to_vmem [thread:$0]  %s6, 512, %s367, [#allocation13], 128, 128, 8
        $region28: #{tpu_custom_call.1} parent=11 // pred_fallthru
          _
        // Predicated region
        $region29: #{tpu_custom_call.1} parent=11 // pred_check
          %p373 = pneg %p229
        $region30: #{tpu_custom_call.1} parent=11 // pred_check_branch
          %375 = sbr.rel (%p373) target = $region32
        $region31: #{tpu_custom_call.1} parent=11 // pred_region
          %s377 = ssub.s32 16, 16
          %378 = vsyncadd [#allocation16], %s377
          %s380 = sshll.u32 [#allocation15], 4
          %s381 = int_to_ptr.vmem [resolvable:$true] %s380
          %383 = dma.hbm_to_vmem [thread:$0]  %s7, 16, %s381, [#allocation16]
        $region32: #{tpu_custom_call.1} parent=11 // pred_fallthru
          _
        // Predicated region
        $region33: #{tpu_custom_call.1} parent=11 // pred_check
          %p384 = pneg %p250
        $region34: #{tpu_custom_call.1} parent=11 // pred_check_branch
          %386 = sbr.rel (%p384) target = $region36
        $region35: #{tpu_custom_call.1} parent=11 // pred_region
          %s388 = ssub.s32 16, 16
          %389 = vsyncadd [#allocation16], %s388
          %s391 = sshll.u32 [#allocation17], 4
          %s392 = int_to_ptr.vmem [resolvable:$true] %s391
          %394 = dma.hbm_to_vmem [thread:$0]  %s8, 16, %s392, [#allocation16]
        $region36: #{tpu_custom_call.1} parent=11 // pred_fallthru
          _
      $region12: #{tpu_custom_call.1} parent=5 // pred_fallthru
        _
      %p395 = scmp.lt.s32.totalorder %s32, 2
      // Predicated region
      $region37: #{tpu_custom_call.1} parent=5 // pred_check
        %p396 = pneg %p395
      $region38: #{tpu_custom_call.1} parent=5 // pred_check_branch
        %398 = sbr.rel (%p396) target = $region40
      $region39: #{tpu_custom_call.1} parent=5 // pred_region
        // Predicated region
        $region41: #{tpu_custom_call.1} parent=39 // pred_check
          %p399 = pneg %p66
        $region42: #{tpu_custom_call.1} parent=39 // pred_check_branch
          %401 = sbr.rel (%p399) target = $region44
        $region43: #{tpu_custom_call.1} parent=39 // pred_region
          %s402 = sand.u32 %s56, 1
          %s403 = scalar_lea.sflag [#allocation4], %s402
          %s404 = sand.u32 %s56, 1
          %s405 = smul.addr %s404, 8
          %s406 = scalar_lea.vmem [#allocation3], %s405
          %s408 = ssub.s32 128, 128
          %409 = vsyncadd %s403, %s408
          %s410 = sadd.s32 %s40, %s39
          %s411 = smul.addr %s410, 128
          %s412 = scalar_lea.hbm %s0, %s411
          %s414 = sshll.u32 %s406, 4
          %s415 = int_to_ptr.vmem [resolvable:$true] %s414
          %417 = dma.hbm_to_vmem [thread:$0]  %s412, 128, %s415, %s403
        $region44: #{tpu_custom_call.1} parent=39 // pred_fallthru
          _
        // Predicated region
        $region45: #{tpu_custom_call.1} parent=39 // pred_check
          %p418 = pneg %p92
        $region46: #{tpu_custom_call.1} parent=39 // pred_check_branch
          %420 = sbr.rel (%p418) target = $region48
        $region47: #{tpu_custom_call.1} parent=39 // pred_region
          %s421 = sand.u32 %s32, 1
          %s422 = scalar_lea.sflag [#allocation7], %s421
          %s423 = sand.u32 %s82, 1
          %s424 = smul.addr %s423, 8
          %s425 = scalar_lea.vmem [#allocation6], %s424
          %s427 = ssub.s32 128, 128
          %428 = vsyncadd %s422, %s427
          %s429 = smul.addr %s39, 128
          %s430 = scalar_lea.hbm %s1, %s429
          %s432 = sshll.u32 %s425, 4
          %s433 = int_to_ptr.vmem [resolvable:$true] %s432
          %435 = dma.hbm_to_vmem [thread:$0]  %s430, 128, %s433, %s422
        $region48: #{tpu_custom_call.1} parent=39 // pred_fallthru
          _
        // Predicated region
        $region49: #{tpu_custom_call.1} parent=39 // pred_check
          %p436 = pneg %p118
        $region50: #{tpu_custom_call.1} parent=39 // pred_check_branch
          %438 = sbr.rel (%p436) target = $region52
        $region51: #{tpu_custom_call.1} parent=39 // pred_region
          %s439 = sand.u32 %s32, 1
          %s440 = scalar_lea.sflag [#allocation7], %s439
          %s441 = sand.u32 %s108, 1
          %s442 = smul.addr %s441, 8
          %s443 = scalar_lea.vmem [#allocation8], %s442
          %s445 = ssub.s32 128, 128
          %446 = vsyncadd %s440, %s445
          %s447 = smul.addr %s39, 128
          %s448 = scalar_lea.hbm %s2, %s447
          %s450 = sshll.u32 %s443, 4
          %s451 = int_to_ptr.vmem [resolvable:$true] %s450
          %453 = dma.hbm_to_vmem [thread:$0]  %s448, 128, %s451, %s440
        $region52: #{tpu_custom_call.1} parent=39 // pred_fallthru
          _
      $region40: #{tpu_custom_call.1} parent=5 // pred_fallthru
        _
      %p454 = scmp.le.s32.totalorder 1, %s32
      %p455 = scmp.lt.s32.totalorder %s32, 3
      %p456 = pnand %p454, %p455
      %p457 = pneg %p456
      // Predicated region
      $region53: #{tpu_custom_call.1} parent=5 // pred_check
        _
      $region54: #{tpu_custom_call.1} parent=5 // pred_check_branch
        %459 = sbr.rel (%p456) target = $region56
      $region55: #{tpu_custom_call.1} parent=5 // pred_region
        %s460 = ssub.s32 %s32, 1
        %s461 = sand.u32 %s59, 1
        %s462 = scalar_lea.sflag [#allocation4], %s461
        %s463 = sand.u32 %s59, 1
        %s464 = smul.addr %s463, 8
        %s465 = scalar_lea.vmem [#allocation3], %s464
        // Predicated region
        $region57: #{tpu_custom_call.1} parent=55 // pred_check
          %p466 = pneg %p72
        $region58: #{tpu_custom_call.1} parent=55 // pred_check_branch
          %468 = sbr.rel (%p466) target = $region60
        $region59: #{tpu_custom_call.1} parent=55 // pred_region
          %469 = dma.done %s462, 128
        $region60: #{tpu_custom_call.1} parent=55 // pred_fallthru
          _
        %s470 = sand.u32 %s37, 1
        %s471 = scalar_lea.sflag [#allocation7], %s470
        %s472 = sand.u32 %s85, 1
        %s473 = smul.addr %s472, 8
        %s474 = scalar_lea.vmem [#allocation6], %s473
        // Predicated region
        $region61: #{tpu_custom_call.1} parent=55 // pred_check
          %p475 = pneg %p98
        $region62: #{tpu_custom_call.1} parent=55 // pred_check_branch
          %477 = sbr.rel (%p475) target = $region64
        $region63: #{tpu_custom_call.1} parent=55 // pred_region
          %478 = dma.done %s471, 128
        $region64: #{tpu_custom_call.1} parent=55 // pred_fallthru
          _
        %s479 = sand.u32 %s37, 1
        %s480 = scalar_lea.sflag [#allocation7], %s479
        %s481 = sand.u32 %s111, 1
        %s482 = smul.addr %s481, 8
        %s483 = scalar_lea.vmem [#allocation8], %s482
        // Predicated region
        $region65: #{tpu_custom_call.1} parent=55 // pred_check
          %p484 = pneg %p124
        $region66: #{tpu_custom_call.1} parent=55 // pred_check_branch
          %486 = sbr.rel (%p484) target = $region68
        $region67: #{tpu_custom_call.1} parent=55 // pred_region
          %487 = dma.done %s480, 128
        $region68: #{tpu_custom_call.1} parent=55 // pred_fallthru
          _
        // Predicated region
        $region69: #{tpu_custom_call.1} parent=55 // pred_check
          %p488 = pneg %p145
        $region70: #{tpu_custom_call.1} parent=55 // pred_check_branch
          %490 = sbr.rel (%p488) target = $region72
        $region71: #{tpu_custom_call.1} parent=55 // pred_region
          %491 = dma.done [#allocation10], 512
        $region72: #{tpu_custom_call.1} parent=55 // pred_fallthru
          _
        // Predicated region
        $region73: #{tpu_custom_call.1} parent=55 // pred_check
          %p492 = pneg %p166
        $region74: #{tpu_custom_call.1} parent=55 // pred_check_branch
          %494 = sbr.rel (%p492) target = $region76
        $region75: #{tpu_custom_call.1} parent=55 // pred_region
          %495 = dma.done [#allocation10], 512
        $region76: #{tpu_custom_call.1} parent=55 // pred_fallthru
          _
        // Predicated region
        $region77: #{tpu_custom_call.1} parent=55 // pred_check
          %p496 = pneg %p187
        $region78: #{tpu_custom_call.1} parent=55 // pred_check_branch
          %498 = sbr.rel (%p496) target = $region80
        $region79: #{tpu_custom_call.1} parent=55 // pred_region
          %499 = dma.done [#allocation13], 512
        $region80: #{tpu_custom_call.1} parent=55 // pred_fallthru
          _
        // Predicated region
        $region81: #{tpu_custom_call.1} parent=55 // pred_check
          %p500 = pneg %p208
        $region82: #{tpu_custom_call.1} parent=55 // pred_check_branch
          %502 = sbr.rel (%p500) target = $region84
        $region83: #{tpu_custom_call.1} parent=55 // pred_region
          %503 = dma.done [#allocation13], 512
        $region84: #{tpu_custom_call.1} parent=55 // pred_fallthru
          _
        // Predicated region
        $region85: #{tpu_custom_call.1} parent=55 // pred_check
          %p504 = pneg %p229
        $region86: #{tpu_custom_call.1} parent=55 // pred_check_branch
          %506 = sbr.rel (%p504) target = $region88
        $region87: #{tpu_custom_call.1} parent=55 // pred_region
          %507 = dma.done [#allocation16], 16
        $region88: #{tpu_custom_call.1} parent=55 // pred_fallthru
          _
        // Predicated region
        $region89: #{tpu_custom_call.1} parent=55 // pred_check
          %p508 = pneg %p250
        $region90: #{tpu_custom_call.1} parent=55 // pred_check_branch
          %510 = sbr.rel (%p508) target = $region92
        $region91: #{tpu_custom_call.1} parent=55 // pred_region
          %511 = dma.done [#allocation16], 16
        $region92: #{tpu_custom_call.1} parent=55 // pred_fallthru
          _
        %s512 = sand.u32 %s59, 1
        %s513 = scalar_lea.sflag [#allocation4], %s512
        %s514 = sand.u32 %s59, 1
        %s515 = smul.addr %s514, 8
        %s516 = scalar_lea.vmem [#allocation3], %s515
        %p517 = pneg %p72
        %p518 = pneg %p69
        %s519 = sand.u32 %s37, 1
        %s520 = scalar_lea.sflag [#allocation7], %s519
        %s521 = sand.u32 %s85, 1
        %s522 = smul.addr %s521, 8
        %s523 = scalar_lea.vmem [#allocation6], %s522
        %p524 = pneg %p98
        %p525 = pneg %p95
        %s526 = sand.u32 %s37, 1
        %s527 = scalar_lea.sflag [#allocation7], %s526
        %s528 = sand.u32 %s111, 1
        %s529 = smul.addr %s528, 8
        %s530 = scalar_lea.vmem [#allocation8], %s529
        %p531 = pneg %p124
        %p532 = pneg %p121
        %p533 = pneg %p145
        %p534 = pneg %p142
        %p535 = pneg %p166
        %p536 = pneg %p163
        %p537 = pneg %p187
        %p538 = pneg %p184
        %p539 = pneg %p208
        %p540 = pneg %p205
        %p541 = pneg %p229
        %p542 = pneg %p226
        %p543 = pneg %p250
        %p544 = pneg %p247
        %p545 = pneg %p278
        %p546 = pneg %p275
        %s547 = sand.u32 %s265, 1
        %s548 = scalar_lea.sflag [#allocation5], %s547
        %s549 = sand.u32 %s265, 1
        %s550 = smul.addr %s549, 8
        %s551 = scalar_lea.vmem [#allocation18], %s550
        %p552 = pneg %p306
        %p553 = pneg %p303
        %s554 = sand.u32 %s293, 1
        %s555 = scalar_lea.sflag [#allocation20], %s554
        %s556 = sand.u32 %s293, 1
        %s557 = smul.addr %s556, 32
        %s558 = scalar_lea.vmem [#allocation19], %s557
        %v559 = vld [vmem:[%s465] sm:$0xff]
        %v560 = vld [vmem:[%s474] sm:$0xff]
        %v561 = vld [vmem:[%s483] sm:$0xff]
        %v562 = vld [vmem:[#allocation9] sm:$0xff]
        %v563 = vld [vmem:[#allocation9 + $0x8] sm:$0xff]
        %v564 = vld [vmem:[#allocation9 + $0x10] sm:$0xff]
        %v565 = vld [vmem:[#allocation9 + $0x18] sm:$0xff]
        %vm566 = vcmask 261120
        %v568 = vsel %vm566, %v559, 0
        %570 = vmatprep.subr.mxu0 0.0
        %571 = vmatpush1.msra.mxu0 %v562
        %572 = vmatprep.subr.mxu0 0.0
        %573 = vmatpush1.msra.mxu0 %v563
        %574 = vmatprep.subr.mxu0 0.0
        %575 = vmatpush1.msra.mxu0 %v564
        %576 = vmatprep.subr.mxu0 0.0
        %577 = vmatpush1.msra.mxu0 %v565
        %578 = vmatprep.subr.mxu0 0.0
        %579 = vmatpush1.msra.mxu0 0.0
        %580 = vmatprep.subr.mxu0 0.0
        %581 = vmatpush1.msra.mxu0 0.0
        %582 = vmatprep.subr.mxu0 0.0
        %583 = vmatpush1.msra.mxu0 0.0
        %584 = vmatprep.subr.mxu0 0.0
        %585 = vmatpush1.msra.mxu0 0.0
        %586 = vmatprep.subr.mxu0 0.0
        %587 = vmatpush1.msra.mxu0 0.0
        %588 = vmatprep.subr.mxu0 0.0
        %589 = vmatpush1.msra.mxu0 0.0
        %590 = vmatprep.subr.mxu0 0.0
        %591 = vmatpush1.msra.mxu0 0.0
        %592 = vmatprep.subr.mxu0 0.0
        %593 = vmatpush1.msra.mxu0 0.0
        %594 = vmatprep.subr.mxu0 0.0
        %595 = vmatpush1.msra.mxu0 0.0
        %596 = vmatprep.subr.mxu0 0.0
        %597 = vmatpush1.msra.mxu0 0.0
        %598 = vmatprep.subr.mxu0 0.0
        %599 = vmatpush1.msra.mxu0 0.0
        %600 = vmatprep.subr.mxu0 0.0
        %601 = vmatpush1.msra.mxu0 0.0
        %602 = vmatprep.subr.mxu0 0.0
        %603 = vmatpush1.msra.mxu0 0.0
        %604 = vmatprep.subr.mxu0 0.0
        %605 = vmatpush1.msra.mxu0 0.0
        %606 = vmatprep.subr.mxu0 0.0
        %607 = vmatpush1.msra.mxu0 0.0
        %608 = vmatprep.subr.mxu0 0.0
        %609 = vmatpush1.msra.mxu0 0.0
        %610 = vmatprep.subr.mxu0 0.0
        %611 = vmatpush1.msra.mxu0 0.0
        %612 = vmatprep.subr.mxu0 0.0
        %613 = vmatpush1.msra.mxu0 0.0
        %614 = vmatprep.subr.mxu0 0.0
        %615 = vmatpush1.msra.mxu0 0.0
        %616 = vmatprep.subr.mxu0 0.0
        %617 = vmatpush1.msra.mxu0 0.0
        %618 = vmatprep.subr.mxu0 0.0
        %619 = vmatpush1.msra.mxu0 0.0
        %620 = vmatprep.subr.mxu0 0.0
        %621 = vmatpush1.msra.mxu0 0.0
        %622 = vmatprep.subr.mxu0 0.0
        %623 = vmatpush1.msra.mxu0 0.0
        %624 = vmatprep.subr.mxu0 0.0
        %625 = vmatpush1.msra.mxu0 0.0
        %626 = vmatprep.subr.mxu0 0.0
        %627 = vmatpush1.msra.mxu0 0.0
        %628 = vmatprep.subr.mxu0 0.0
        %629 = vmatpush1.msra.mxu0 0.0
        %630 = vmatprep.subr.mxu0 0.0
        %631 = vmatpush1.msra.mxu0 0.0
        %632 = vmatprep.subr.mxu0 0.0
        %633 = vmatpush1.msra.mxu0 0.0
        %634 = vmatprep.mubr.f32.mxu0 0.0
        %635 = vmatmul.mubr.f32.gmra.mrb[0].mxu0 %v568
        %v636 = vpop.f32.mrb[0].mxu0
        %v637 = vadd.f32 0.0, %v636
        %v638 = vpop.f32.mrb[0].mxu0
        %639 = vdwg.mxu0
        %v640 = vld [vmem:[#allocation11] sm:$0xff]
        %v641 = vld [vmem:[#allocation11 + $0x8] sm:$0xff]
        %v642 = vld [vmem:[#allocation11 + $0x10] sm:$0xff]
        %v643 = vld [vmem:[#allocation11 + $0x18] sm:$0xff]
        %v645 = vsel %vm566, %v560, 0
        %647 = vmatprep.subr.mxu0 0.0
        %648 = vmatpush1.msra.mxu0 %v640
        %649 = vmatprep.subr.mxu0 0.0
        %650 = vmatpush1.msra.mxu0 %v641
        %651 = vmatprep.subr.mxu0 0.0
        %652 = vmatpush1.msra.mxu0 %v642
        %653 = vmatprep.subr.mxu0 0.0
        %654 = vmatpush1.msra.mxu0 %v643
        %655 = vmatprep.subr.mxu0 0.0
        %656 = vmatpush1.msra.mxu0 0.0
        %657 = vmatprep.subr.mxu0 0.0
        %658 = vmatpush1.msra.mxu0 0.0
        %659 = vmatprep.subr.mxu0 0.0
        %660 = vmatpush1.msra.mxu0 0.0
        %661 = vmatprep.subr.mxu0 0.0
        %662 = vmatpush1.msra.mxu0 0.0
        %663 = vmatprep.subr.mxu0 0.0
        %664 = vmatpush1.msra.mxu0 0.0
        %665 = vmatprep.subr.mxu0 0.0
        %666 = vmatpush1.msra.mxu0 0.0
        %667 = vmatprep.subr.mxu0 0.0
        %668 = vmatpush1.msra.mxu0 0.0
        %669 = vmatprep.subr.mxu0 0.0
        %670 = vmatpush1.msra.mxu0 0.0
        %671 = vmatprep.subr.mxu0 0.0
        %672 = vmatpush1.msra.mxu0 0.0
        %673 = vmatprep.subr.mxu0 0.0
        %674 = vmatpush1.msra.mxu0 0.0
        %675 = vmatprep.subr.mxu0 0.0
        %676 = vmatpush1.msra.mxu0 0.0
        %677 = vmatprep.subr.mxu0 0.0
        %678 = vmatpush1.msra.mxu0 0.0
        %679 = vmatprep.subr.mxu0 0.0
        %680 = vmatpush1.msra.mxu0 0.0
        %681 = vmatprep.subr.mxu0 0.0
        %682 = vmatpush1.msra.mxu0 0.0
        %683 = vmatprep.subr.mxu0 0.0
        %684 = vmatpush1.msra.mxu0 0.0
        %685 = vmatprep.subr.mxu0 0.0
        %686 = vmatpush1.msra.mxu0 0.0
        %687 = vmatprep.subr.mxu0 0.0
        %688 = vmatpush1.msra.mxu0 0.0
        %689 = vmatprep.subr.mxu0 0.0
        %690 = vmatpush1.msra.mxu0 0.0
        %691 = vmatprep.subr.mxu0 0.0
        %692 = vmatpush1.msra.mxu0 0.0
        %693 = vmatprep.subr.mxu0 0.0
        %694 = vmatpush1.msra.mxu0 0.0
        %695 = vmatprep.subr.mxu0 0.0
        %696 = vmatpush1.msra.mxu0 0.0
        %697 = vmatprep.subr.mxu0 0.0
        %698 = vmatpush1.msra.mxu0 0.0
        %699 = vmatprep.subr.mxu0 0.0
        %700 = vmatpush1.msra.mxu0 0.0
        %701 = vmatprep.subr.mxu0 0.0
        %702 = vmatpush1.msra.mxu0 0.0
        %703 = vmatprep.subr.mxu0 0.0
        %704 = vmatpush1.msra.mxu0 0.0
        %705 = vmatprep.subr.mxu0 0.0
        %706 = vmatpush1.msra.mxu0 0.0
        %707 = vmatprep.subr.mxu0 0.0
        %708 = vmatpush1.msra.mxu0 0.0
        %709 = vmatprep.subr.mxu0 0.0
        %710 = vmatpush1.msra.mxu0 0.0
        %711 = vmatprep.mubr.f32.mxu0 0.0
        %712 = vmatmul.mubr.f32.gmra.mrb[0].mxu0 %v645
        %v713 = vpop.f32.mrb[0].mxu0
        %v714 = vadd.f32 0.0, %v713
        %v715 = vpop.f32.mrb[0].mxu0
        %716 = vdwg.mxu0
        %v717 = vld [vmem:[#allocation12] sm:$0xff]
        %v718 = vld [vmem:[#allocation12 + $0x8] sm:$0xff]
        %v719 = vld [vmem:[#allocation12 + $0x10] sm:$0xff]
        %v720 = vld [vmem:[#allocation12 + $0x18] sm:$0xff]
        %v722 = vsel %vm566, %v561, 0
        %724 = vmatprep.subr.mxu0 0.0
        %725 = vmatpush1.msra.mxu0 %v717
        %726 = vmatprep.subr.mxu0 0.0
        %727 = vmatpush1.msra.mxu0 %v718
        %728 = vmatprep.subr.mxu0 0.0
        %729 = vmatpush1.msra.mxu0 %v719
        %730 = vmatprep.subr.mxu0 0.0
        %731 = vmatpush1.msra.mxu0 %v720
        %732 = vmatprep.subr.mxu0 0.0
        %733 = vmatpush1.msra.mxu0 0.0
        %734 = vmatprep.subr.mxu0 0.0
        %735 = vmatpush1.msra.mxu0 0.0
        %736 = vmatprep.subr.mxu0 0.0
        %737 = vmatpush1.msra.mxu0 0.0
        %738 = vmatprep.subr.mxu0 0.0
        %739 = vmatpush1.msra.mxu0 0.0
        %740 = vmatprep.subr.mxu0 0.0
        %741 = vmatpush1.msra.mxu0 0.0
        %742 = vmatprep.subr.mxu0 0.0
        %743 = vmatpush1.msra.mxu0 0.0
        %744 = vmatprep.subr.mxu0 0.0
        %745 = vmatpush1.msra.mxu0 0.0
        %746 = vmatprep.subr.mxu0 0.0
        %747 = vmatpush1.msra.mxu0 0.0
        %748 = vmatprep.subr.mxu0 0.0
        %749 = vmatpush1.msra.mxu0 0.0
        %750 = vmatprep.subr.mxu0 0.0
        %751 = vmatpush1.msra.mxu0 0.0
        %752 = vmatprep.subr.mxu0 0.0
        %753 = vmatpush1.msra.mxu0 0.0
        %754 = vmatprep.subr.mxu0 0.0
        %755 = vmatpush1.msra.mxu0 0.0
        %756 = vmatprep.subr.mxu0 0.0
        %757 = vmatpush1.msra.mxu0 0.0
        %758 = vmatprep.subr.mxu0 0.0
        %759 = vmatpush1.msra.mxu0 0.0
        %760 = vmatprep.subr.mxu0 0.0
        %761 = vmatpush1.msra.mxu0 0.0
        %762 = vmatprep.subr.mxu0 0.0
        %763 = vmatpush1.msra.mxu0 0.0
        %764 = vmatprep.subr.mxu0 0.0
        %765 = vmatpush1.msra.mxu0 0.0
        %766 = vmatprep.subr.mxu0 0.0
        %767 = vmatpush1.msra.mxu0 0.0
        %768 = vmatprep.subr.mxu0 0.0
        %769 = vmatpush1.msra.mxu0 0.0
        %770 = vmatprep.subr.mxu0 0.0
        %771 = vmatpush1.msra.mxu0 0.0
        %772 = vmatprep.subr.mxu0 0.0
        %773 = vmatpush1.msra.mxu0 0.0
        %774 = vmatprep.subr.mxu0 0.0
        %775 = vmatpush1.msra.mxu0 0.0
        %776 = vmatprep.subr.mxu0 0.0
        %777 = vmatpush1.msra.mxu0 0.0
        %778 = vmatprep.subr.mxu0 0.0
        %779 = vmatpush1.msra.mxu0 0.0
        %780 = vmatprep.subr.mxu0 0.0
        %781 = vmatpush1.msra.mxu0 0.0
        %782 = vmatprep.subr.mxu0 0.0
        %783 = vmatpush1.msra.mxu0 0.0
        %784 = vmatprep.subr.mxu0 0.0
        %785 = vmatpush1.msra.mxu0 0.0
        %786 = vmatprep.subr.mxu0 0.0
        %787 = vmatpush1.msra.mxu0 0.0
        %788 = vmatprep.mubr.f32.mxu0 0.0
        %789 = vmatmul.mubr.f32.gmra.mrb[0].mxu0 %v722
        %v790 = vpop.f32.mrb[0].mxu0
        %v791 = vadd.f32 0.0, %v790
        %v792 = vpop.f32.mrb[0].mxu0
        %793 = vdwg.mxu0
        %vm794 = vcmask 64512
        %v796 = vsel %vm794, %v637, 0
        %v799 = vsel %vm794, %v714, 0
        %801 = vmatprep.subr.mxu0 0.0
        %802 = vmatpush1.xpose.msra.mxu0 %v799
        %803 = vmatprep.subr.mxu0 0.0
        %804 = vmatpush1.xpose.msra.mxu0 0.0
        %805 = vmatprep.subr.mxu0 0.0
        %806 = vmatpush1.xpose.msra.mxu0 0.0
        %807 = vmatprep.subr.mxu0 0.0
        %808 = vmatpush1.xpose.msra.mxu0 0.0
        %809 = vmatprep.subr.mxu0 0.0
        %810 = vmatpush1.xpose.msra.mxu0 0.0
        %811 = vmatprep.subr.mxu0 0.0
        %812 = vmatpush1.xpose.msra.mxu0 0.0
        %813 = vmatprep.subr.mxu0 0.0
        %814 = vmatpush1.xpose.msra.mxu0 0.0
        %815 = vmatprep.subr.mxu0 0.0
        %816 = vmatpush1.xpose.msra.mxu0 0.0
        %817 = vmatprep.subr.mxu0 0.0
        %818 = vmatpush1.xpose.msra.mxu0 0.0
        %819 = vmatprep.subr.mxu0 0.0
        %820 = vmatpush1.xpose.msra.mxu0 0.0
        %821 = vmatprep.subr.mxu0 0.0
        %822 = vmatpush1.xpose.msra.mxu0 0.0
        %823 = vmatprep.subr.mxu0 0.0
        %824 = vmatpush1.xpose.msra.mxu0 0.0
        %825 = vmatprep.subr.mxu0 0.0
        %826 = vmatpush1.xpose.msra.mxu0 0.0
        %827 = vmatprep.subr.mxu0 0.0
        %828 = vmatpush1.xpose.msra.mxu0 0.0
        %829 = vmatprep.subr.mxu0 0.0
        %830 = vmatpush1.xpose.msra.mxu0 0.0
        %831 = vmatprep.subr.mxu0 0.0
        %832 = vmatpush1.xpose.msra.mxu0 0.0
        %833 = vmatprep.subr.mxu0 0.0
        %834 = vmatpush1.xpose.msra.mxu0 0.0
        %835 = vmatprep.subr.mxu0 0.0
        %836 = vmatpush1.xpose.msra.mxu0 0.0
        %837 = vmatprep.subr.mxu0 0.0
        %838 = vmatpush1.xpose.msra.mxu0 0.0
        %839 = vmatprep.subr.mxu0 0.0
        %840 = vmatpush1.xpose.msra.mxu0 0.0
        %841 = vmatprep.subr.mxu0 0.0
        %842 = vmatpush1.xpose.msra.mxu0 0.0
        %843 = vmatprep.subr.mxu0 0.0
        %844 = vmatpush1.xpose.msra.mxu0 0.0
        %845 = vmatprep.subr.mxu0 0.0
        %846 = vmatpush1.xpose.msra.mxu0 0.0
        %847 = vmatprep.subr.mxu0 0.0
        %848 = vmatpush1.xpose.msra.mxu0 0.0
        %849 = vmatprep.subr.mxu0 0.0
        %850 = vmatpush1.xpose.msra.mxu0 0.0
        %851 = vmatprep.subr.mxu0 0.0
        %852 = vmatpush1.xpose.msra.mxu0 0.0
        %853 = vmatprep.subr.mxu0 0.0
        %854 = vmatpush1.xpose.msra.mxu0 0.0
        %855 = vmatprep.subr.mxu0 0.0
        %856 = vmatpush1.xpose.msra.mxu0 0.0
        %857 = vmatprep.subr.mxu0 0.0
        %858 = vmatpush1.xpose.msra.mxu0 0.0
        %859 = vmatprep.subr.mxu0 0.0
        %860 = vmatpush1.xpose.msra.mxu0 0.0
        %861 = vmatprep.subr.mxu0 0.0
        %862 = vmatpush1.xpose.msra.mxu0 0.0
        %863 = vmatprep.subr.mxu0 0.0
        %864 = vmatpush1.xpose.msra.mxu0 0.0
        %865 = vmatprep.mubr.f32.mxu0 0.0
        %866 = vmatmul.mubr.f32.gmra.mrb[0].mxu0 %v796
        %v867 = vpop.f32.mrb[0].mxu0
        %v868 = vadd.f32 0.0, %v867
        %v869 = vpop.f32.mrb[0].mxu0
        %870 = vdwg.mxu0
        %v871 = vsel %vm794, %v868, -inf
        %872 = vmax.xlane.f32.xlu0 %v871
        %v873 = vpop.xlane.xlu0 %872
        %v874 = vsub.f32 %v868, %v873
        %v875 = vmul.f32 %v874, 1.442695
        %v876 = vpow.pop %v875
        %v877 = vsel %vm794, %v876, 0.0
        %878 = vadd.xlane.f32.xlu0 %v877
        %v879 = vpop.xlane.xlu0 %878
        %v880 = vrcp.pop %v879
        %v881 = vmul.f32 1.0, %v880
        %v882 = vmul.f32 %v876, %v881
        %883 = vst.msk [vmem:[%s558] sm:$0xff] %vm794, %v882
        %v885 = vsel %vm794, %v882, 0
        %887 = vmatprep.subr.mxu0 0.0
        %888 = vmatpush1.msra.mxu0 %v791
        %889 = vmatprep.subr.mxu0 0.0
        %890 = vmatpush1.msra.mxu0 0.0
        %891 = vmatprep.subr.mxu0 0.0
        %892 = vmatpush1.msra.mxu0 0.0
        %893 = vmatprep.subr.mxu0 0.0
        %894 = vmatpush1.msra.mxu0 0.0
        %895 = vmatprep.subr.mxu0 0.0
        %896 = vmatpush1.msra.mxu0 0.0
        %897 = vmatprep.subr.mxu0 0.0
        %898 = vmatpush1.msra.mxu0 0.0
        %899 = vmatprep.subr.mxu0 0.0
        %900 = vmatpush1.msra.mxu0 0.0
        %901 = vmatprep.subr.mxu0 0.0
        %902 = vmatpush1.msra.mxu0 0.0
        %903 = vmatprep.subr.mxu0 0.0
        %904 = vmatpush1.msra.mxu0 0.0
        %905 = vmatprep.subr.mxu0 0.0
        %906 = vmatpush1.msra.mxu0 0.0
        %907 = vmatprep.subr.mxu0 0.0
        %908 = vmatpush1.msra.mxu0 0.0
        %909 = vmatprep.subr.mxu0 0.0
        %910 = vmatpush1.msra.mxu0 0.0
        %911 = vmatprep.subr.mxu0 0.0
        %912 = vmatpush1.msra.mxu0 0.0
        %913 = vmatprep.subr.mxu0 0.0
        %914 = vmatpush1.msra.mxu0 0.0
        %915 = vmatprep.subr.mxu0 0.0
        %916 = vmatpush1.msra.mxu0 0.0
        %917 = vmatprep.subr.mxu0 0.0
        %918 = vmatpush1.msra.mxu0 0.0
        %919 = vmatprep.subr.mxu0 0.0
        %920 = vmatpush1.msra.mxu0 0.0
        %921 = vmatprep.subr.mxu0 0.0
        %922 = vmatpush1.msra.mxu0 0.0
        %923 = vmatprep.subr.mxu0 0.0
        %924 = vmatpush1.msra.mxu0 0.0
        %925 = vmatprep.subr.mxu0 0.0
        %926 = vmatpush1.msra.mxu0 0.0
        %927 = vmatprep.subr.mxu0 0.0
        %928 = vmatpush1.msra.mxu0 0.0
        %929 = vmatprep.subr.mxu0 0.0
        %930 = vmatpush1.msra.mxu0 0.0
        %931 = vmatprep.subr.mxu0 0.0
        %932 = vmatpush1.msra.mxu0 0.0
        %933 = vmatprep.subr.mxu0 0.0
        %934 = vmatpush1.msra.mxu0 0.0
        %935 = vmatprep.subr.mxu0 0.0
        %936 = vmatpush1.msra.mxu0 0.0
        %937 = vmatprep.subr.mxu0 0.0
        %938 = vmatpush1.msra.mxu0 0.0
        %939 = vmatprep.subr.mxu0 0.0
        %940 = vmatpush1.msra.mxu0 0.0
        %941 = vmatprep.subr.mxu0 0.0
        %942 = vmatpush1.msra.mxu0 0.0
        %943 = vmatprep.subr.mxu0 0.0
        %944 = vmatpush1.msra.mxu0 0.0
        %945 = vmatprep.subr.mxu0 0.0
        %946 = vmatpush1.msra.mxu0 0.0
        %947 = vmatprep.subr.mxu0 0.0
        %948 = vmatpush1.msra.mxu0 0.0
        %949 = vmatprep.subr.mxu0 0.0
        %950 = vmatpush1.msra.mxu0 0.0
        %951 = vmatprep.mubr.f32.mxu0 0.0
        %952 = vmatmul.mubr.f32.gmra.mrb[0].mxu0 %v885
        %v953 = vpop.f32.mrb[0].mxu0
        %v954 = vadd.f32 0.0, %v953
        %v955 = vpop.f32.mrb[0].mxu0
        %956 = vdwg.mxu0
        %957 = vst.msk [vmem:[#allocation2] sm:$0xff] %vm794, %v954
        %958 = vrot.lane.b32.xlu0 %v637, 120
        %v959 = vpop.permute.xlu0 %958
        %960 = vrot.lane.b32.xlu0 %v714, 120
        %v961 = vpop.permute.xlu0 %960
        %v962 = vsel %vm794, %v959, 0
        %v964 = vsel %vm794, %v961, 0
        %966 = vmatprep.subr.mxu0 0.0
        %967 = vmatpush1.xpose.msra.mxu0 %v964
        %968 = vmatprep.subr.mxu0 0.0
        %969 = vmatpush1.xpose.msra.mxu0 0.0
        %970 = vmatprep.subr.mxu0 0.0
        %971 = vmatpush1.xpose.msra.mxu0 0.0
        %972 = vmatprep.subr.mxu0 0.0
        %973 = vmatpush1.xpose.msra.mxu0 0.0
        %974 = vmatprep.subr.mxu0 0.0
        %975 = vmatpush1.xpose.msra.mxu0 0.0
        %976 = vmatprep.subr.mxu0 0.0
        %977 = vmatpush1.xpose.msra.mxu0 0.0
        %978 = vmatprep.subr.mxu0 0.0
        %979 = vmatpush1.xpose.msra.mxu0 0.0
        %980 = vmatprep.subr.mxu0 0.0
        %981 = vmatpush1.xpose.msra.mxu0 0.0
        %982 = vmatprep.subr.mxu0 0.0
        %983 = vmatpush1.xpose.msra.mxu0 0.0
        %984 = vmatprep.subr.mxu0 0.0
        %985 = vmatpush1.xpose.msra.mxu0 0.0
        %986 = vmatprep.subr.mxu0 0.0
        %987 = vmatpush1.xpose.msra.mxu0 0.0
        %988 = vmatprep.subr.mxu0 0.0
        %989 = vmatpush1.xpose.msra.mxu0 0.0
        %990 = vmatprep.subr.mxu0 0.0
        %991 = vmatpush1.xpose.msra.mxu0 0.0
        %992 = vmatprep.subr.mxu0 0.0
        %993 = vmatpush1.xpose.msra.mxu0 0.0
        %994 = vmatprep.subr.mxu0 0.0
        %995 = vmatpush1.xpose.msra.mxu0 0.0
        %996 = vmatprep.subr.mxu0 0.0
        %997 = vmatpush1.xpose.msra.mxu0 0.0
        %998 = vmatprep.subr.mxu0 0.0
        %999 = vmatpush1.xpose.msra.mxu0 0.0
        %1000 = vmatprep.subr.mxu0 0.0
        %1001 = vmatpush1.xpose.msra.mxu0 0.0
        %1002 = vmatprep.subr.mxu0 0.0
        %1003 = vmatpush1.xpose.msra.mxu0 0.0
        %1004 = vmatprep.subr.mxu0 0.0
        %1005 = vmatpush1.xpose.msra.mxu0 0.0
        %1006 = vmatprep.subr.mxu0 0.0
        %1007 = vmatpush1.xpose.msra.mxu0 0.0
        %1008 = vmatprep.subr.mxu0 0.0
        %1009 = vmatpush1.xpose.msra.mxu0 0.0
        %1010 = vmatprep.subr.mxu0 0.0
        %1011 = vmatpush1.xpose.msra.mxu0 0.0
        %1012 = vmatprep.subr.mxu0 0.0
        %1013 = vmatpush1.xpose.msra.mxu0 0.0
        %1014 = vmatprep.subr.mxu0 0.0
        %1015 = vmatpush1.xpose.msra.mxu0 0.0
        %1016 = vmatprep.subr.mxu0 0.0
        %1017 = vmatpush1.xpose.msra.mxu0 0.0
        %1018 = vmatprep.subr.mxu0 0.0
        %1019 = vmatpush1.xpose.msra.mxu0 0.0
        %1020 = vmatprep.subr.mxu0 0.0
        %1021 = vmatpush1.xpose.msra.mxu0 0.0
        %1022 = vmatprep.subr.mxu0 0.0
        %1023 = vmatpush1.xpose.msra.mxu0 0.0
        %1024 = vmatprep.subr.mxu0 0.0
        %1025 = vmatpush1.xpose.msra.mxu0 0.0
        %1026 = vmatprep.subr.mxu0 0.0
        %1027 = vmatpush1.xpose.msra.mxu0 0.0
        %1028 = vmatprep.subr.mxu0 0.0
        %1029 = vmatpush1.xpose.msra.mxu0 0.0
        %1030 = vmatprep.mubr.f32.mxu0 0.0
        %1031 = vmatmul.mubr.f32.gmra.mrb[0].mxu0 %v962
        %v1032 = vpop.f32.mrb[0].mxu0
        %v1033 = vadd.f32 0.0, %v1032
        %v1034 = vpop.f32.mrb[0].mxu0
        %1035 = vdwg.mxu0
        %v1036 = vsel %vm794, %v1033, -inf
        %1037 = vmax.xlane.f32.xlu0 %v1036
        %v1038 = vpop.xlane.xlu0 %1037
        %v1039 = vsub.f32 %v1033, %v1038
        %v1040 = vmul.f32 %v1039, 1.442695
        %v1041 = vpow.pop %v1040
        %v1042 = vsel %vm794, %v1041, 0.0
        %1043 = vadd.xlane.f32.xlu0 %v1042
        %v1044 = vpop.xlane.xlu0 %1043
        %v1045 = vrcp.pop %v1044
        %v1046 = vmul.f32 1.0, %v1045
        %v1047 = vmul.f32 %v1041, %v1046
        %s1048 = scalar_lea.vmem %s558, 8 [#allocation19]
        %1049 = vst.msk [vmem:[%s1048] sm:$0xff] %vm794, %v1047
        %1051 = vrot.lane.b32.xlu0 %v791, 120
        %v1052 = vpop.permute.xlu0 %1051
        %v1055 = vsel %vm794, %v1047, 0
        %1057 = vmatprep.subr.mxu0 0.0
        %1058 = vmatpush1.msra.mxu0 %v1052
        %1059 = vmatprep.subr.mxu0 0.0
        %1060 = vmatpush1.msra.mxu0 0.0
        %1061 = vmatprep.subr.mxu0 0.0
        %1062 = vmatpush1.msra.mxu0 0.0
        %1063 = vmatprep.subr.mxu0 0.0
        %1064 = vmatpush1.msra.mxu0 0.0
        %1065 = vmatprep.subr.mxu0 0.0
        %1066 = vmatpush1.msra.mxu0 0.0
        %1067 = vmatprep.subr.mxu0 0.0
        %1068 = vmatpush1.msra.mxu0 0.0
        %1069 = vmatprep.subr.mxu0 0.0
        %1070 = vmatpush1.msra.mxu0 0.0
        %1071 = vmatprep.subr.mxu0 0.0
        %1072 = vmatpush1.msra.mxu0 0.0
        %1073 = vmatprep.subr.mxu0 0.0
        %1074 = vmatpush1.msra.mxu0 0.0
        %1075 = vmatprep.subr.mxu0 0.0
        %1076 = vmatpush1.msra.mxu0 0.0
        %1077 = vmatprep.subr.mxu0 0.0
        %1078 = vmatpush1.msra.mxu0 0.0
        %1079 = vmatprep.subr.mxu0 0.0
        %1080 = vmatpush1.msra.mxu0 0.0
        %1081 = vmatprep.subr.mxu0 0.0
        %1082 = vmatpush1.msra.mxu0 0.0
        %1083 = vmatprep.subr.mxu0 0.0
        %1084 = vmatpush1.msra.mxu0 0.0
        %1085 = vmatprep.subr.mxu0 0.0
        %1086 = vmatpush1.msra.mxu0 0.0
        %1087 = vmatprep.subr.mxu0 0.0
        %1088 = vmatpush1.msra.mxu0 0.0
        %1089 = vmatprep.subr.mxu0 0.0
        %1090 = vmatpush1.msra.mxu0 0.0
        %1091 = vmatprep.subr.mxu0 0.0
        %1092 = vmatpush1.msra.mxu0 0.0
        %1093 = vmatprep.subr.mxu0 0.0
        %1094 = vmatpush1.msra.mxu0 0.0
        %1095 = vmatprep.subr.mxu0 0.0
        %1096 = vmatpush1.msra.mxu0 0.0
        %1097 = vmatprep.subr.mxu0 0.0
        %1098 = vmatpush1.msra.mxu0 0.0
        %1099 = vmatprep.subr.mxu0 0.0
        %1100 = vmatpush1.msra.mxu0 0.0
        %1101 = vmatprep.subr.mxu0 0.0
        %1102 = vmatpush1.msra.mxu0 0.0
        %1103 = vmatprep.subr.mxu0 0.0
        %1104 = vmatpush1.msra.mxu0 0.0
        %1105 = vmatprep.subr.mxu0 0.0
        %1106 = vmatpush1.msra.mxu0 0.0
        %1107 = vmatprep.subr.mxu0 0.0
        %1108 = vmatpush1.msra.mxu0 0.0
        %1109 = vmatprep.subr.mxu0 0.0
        %1110 = vmatpush1.msra.mxu0 0.0
        %1111 = vmatprep.subr.mxu0 0.0
        %1112 = vmatpush1.msra.mxu0 0.0
        %1113 = vmatprep.subr.mxu0 0.0
        %1114 = vmatpush1.msra.mxu0 0.0
        %1115 = vmatprep.subr.mxu0 0.0
        %1116 = vmatpush1.msra.mxu0 0.0
        %1117 = vmatprep.subr.mxu0 0.0
        %1118 = vmatpush1.msra.mxu0 0.0
        %1119 = vmatprep.subr.mxu0 0.0
        %1120 = vmatpush1.msra.mxu0 0.0
        %1121 = vmatprep.mubr.f32.mxu0 0.0
        %1122 = vmatmul.mubr.f32.gmra.mrb[0].mxu0 %v1055
        %v1123 = vpop.f32.mrb[0].mxu0
        %v1124 = vadd.f32 0.0, %v1123
        %v1125 = vpop.f32.mrb[0].mxu0
        %1126 = vdwg.mxu0
        %1128 = vrot.lane.b32.xlu0 %v1124, 8
        %v1129 = vpop.permute.xlu0 %1128
        %vm1131 = vcmask 130112
        %1132 = vst.msk [vmem:[#allocation2] sm:$0xff] %vm1131, %v1129
        %1133 = vrot.lane.b32.xlu0 %v637, 112
        %v1134 = vpop.permute.xlu0 %1133
        %1135 = vrot.lane.b32.xlu0 %v714, 112
        %v1136 = vpop.permute.xlu0 %1135
        %v1137 = vsel %vm794, %v1134, 0
        %v1139 = vsel %vm794, %v1136, 0
        %1141 = vmatprep.subr.mxu0 0.0
        %1142 = vmatpush1.xpose.msra.mxu0 %v1139
        %1143 = vmatprep.subr.mxu0 0.0
        %1144 = vmatpush1.xpose.msra.mxu0 0.0
        %1145 = vmatprep.subr.mxu0 0.0
        %1146 = vmatpush1.xpose.msra.mxu0 0.0
        %1147 = vmatprep.subr.mxu0 0.0
        %1148 = vmatpush1.xpose.msra.mxu0 0.0
        %1149 = vmatprep.subr.mxu0 0.0
        %1150 = vmatpush1.xpose.msra.mxu0 0.0
        %1151 = vmatprep.subr.mxu0 0.0
        %1152 = vmatpush1.xpose.msra.mxu0 0.0
        %1153 = vmatprep.subr.mxu0 0.0
        %1154 = vmatpush1.xpose.msra.mxu0 0.0
        %1155 = vmatprep.subr.mxu0 0.0
        %1156 = vmatpush1.xpose.msra.mxu0 0.0
        %1157 = vmatprep.subr.mxu0 0.0
        %1158 = vmatpush1.xpose.msra.mxu0 0.0
        %1159 = vmatprep.subr.mxu0 0.0
        %1160 = vmatpush1.xpose.msra.mxu0 0.0
        %1161 = vmatprep.subr.mxu0 0.0
        %1162 = vmatpush1.xpose.msra.mxu0 0.0
        %1163 = vmatprep.subr.mxu0 0.0
        %1164 = vmatpush1.xpose.msra.mxu0 0.0
        %1165 = vmatprep.subr.mxu0 0.0
        %1166 = vmatpush1.xpose.msra.mxu0 0.0
        %1167 = vmatprep.subr.mxu0 0.0
        %1168 = vmatpush1.xpose.msra.mxu0 0.0
        %1169 = vmatprep.subr.mxu0 0.0
        %1170 = vmatpush1.xpose.msra.mxu0 0.0
        %1171 = vmatprep.subr.mxu0 0.0
        %1172 = vmatpush1.xpose.msra.mxu0 0.0
        %1173 = vmatprep.subr.mxu0 0.0
        %1174 = vmatpush1.xpose.msra.mxu0 0.0
        %1175 = vmatprep.subr.mxu0 0.0
        %1176 = vmatpush1.xpose.msra.mxu0 0.0
        %1177 = vmatprep.subr.mxu0 0.0
        %1178 = vmatpush1.xpose.msra.mxu0 0.0
        %1179 = vmatprep.subr.mxu0 0.0
        %1180 = vmatpush1.xpose.msra.mxu0 0.0
        %1181 = vmatprep.subr.mxu0 0.0
        %1182 = vmatpush1.xpose.msra.mxu0 0.0
        %1183 = vmatprep.subr.mxu0 0.0
        %1184 = vmatpush1.xpose.msra.mxu0 0.0
        %1185 = vmatprep.subr.mxu0 0.0
        %1186 = vmatpush1.xpose.msra.mxu0 0.0
        %1187 = vmatprep.subr.mxu0 0.0
        %1188 = vmatpush1.xpose.msra.mxu0 0.0
        %1189 = vmatprep.subr.mxu0 0.0
        %1190 = vmatpush1.xpose.msra.mxu0 0.0
        %1191 = vmatprep.subr.mxu0 0.0
        %1192 = vmatpush1.xpose.msra.mxu0 0.0
        %1193 = vmatprep.subr.mxu0 0.0
        %1194 = vmatpush1.xpose.msra.mxu0 0.0
        %1195 = vmatprep.subr.mxu0 0.0
        %1196 = vmatpush1.xpose.msra.mxu0 0.0
        %1197 = vmatprep.subr.mxu0 0.0
        %1198 = vmatpush1.xpose.msra.mxu0 0.0
        %1199 = vmatprep.subr.mxu0 0.0
        %1200 = vmatpush1.xpose.msra.mxu0 0.0
        %1201 = vmatprep.subr.mxu0 0.0
        %1202 = vmatpush1.xpose.msra.mxu0 0.0
        %1203 = vmatprep.subr.mxu0 0.0
        %1204 = vmatpush1.xpose.msra.mxu0 0.0
        %1205 = vmatprep.mubr.f32.mxu0 0.0
        %1206 = vmatmul.mubr.f32.gmra.mrb[0].mxu0 %v1137
        %v1207 = vpop.f32.mrb[0].mxu0
        %v1208 = vadd.f32 0.0, %v1207
        %v1209 = vpop.f32.mrb[0].mxu0
        %1210 = vdwg.mxu0
        %v1211 = vsel %vm794, %v1208, -inf
        %1212 = vmax.xlane.f32.xlu0 %v1211
        %v1213 = vpop.xlane.xlu0 %1212
        %v1214 = vsub.f32 %v1208, %v1213
        %v1215 = vmul.f32 %v1214, 1.442695
        %v1216 = vpow.pop %v1215
        %v1217 = vsel %vm794, %v1216, 0.0
        %1218 = vadd.xlane.f32.xlu0 %v1217
        %v1219 = vpop.xlane.xlu0 %1218
        %v1220 = vrcp.pop %v1219
        %v1221 = vmul.f32 1.0, %v1220
        %v1222 = vmul.f32 %v1216, %v1221
        %s1223 = scalar_lea.vmem %s558, 16 [#allocation19]
        %1224 = vst.msk [vmem:[%s1223] sm:$0xff] %vm794, %v1222
        %1225 = vrot.lane.b32.xlu0 %v791, 112
        %v1226 = vpop.permute.xlu0 %1225
        %v1229 = vsel %vm794, %v1222, 0
        %1231 = vmatprep.subr.mxu0 0.0
        %1232 = vmatpush1.msra.mxu0 %v1226
        %1233 = vmatprep.subr.mxu0 0.0
        %1234 = vmatpush1.msra.mxu0 0.0
        %1235 = vmatprep.subr.mxu0 0.0
        %1236 = vmatpush1.msra.mxu0 0.0
        %1237 = vmatprep.subr.mxu0 0.0
        %1238 = vmatpush1.msra.mxu0 0.0
        %1239 = vmatprep.subr.mxu0 0.0
        %1240 = vmatpush1.msra.mxu0 0.0
        %1241 = vmatprep.subr.mxu0 0.0
        %1242 = vmatpush1.msra.mxu0 0.0
        %1243 = vmatprep.subr.mxu0 0.0
        %1244 = vmatpush1.msra.mxu0 0.0
        %1245 = vmatprep.subr.mxu0 0.0
        %1246 = vmatpush1.msra.mxu0 0.0
        %1247 = vmatprep.subr.mxu0 0.0
        %1248 = vmatpush1.msra.mxu0 0.0
        %1249 = vmatprep.subr.mxu0 0.0
        %1250 = vmatpush1.msra.mxu0 0.0
        %1251 = vmatprep.subr.mxu0 0.0
        %1252 = vmatpush1.msra.mxu0 0.0
        %1253 = vmatprep.subr.mxu0 0.0
        %1254 = vmatpush1.msra.mxu0 0.0
        %1255 = vmatprep.subr.mxu0 0.0
        %1256 = vmatpush1.msra.mxu0 0.0
        %1257 = vmatprep.subr.mxu0 0.0
        %1258 = vmatpush1.msra.mxu0 0.0
        %1259 = vmatprep.subr.mxu0 0.0
        %1260 = vmatpush1.msra.mxu0 0.0
        %1261 = vmatprep.subr.mxu0 0.0
        %1262 = vmatpush1.msra.mxu0 0.0
        %1263 = vmatprep.subr.mxu0 0.0
        %1264 = vmatpush1.msra.mxu0 0.0
        %1265 = vmatprep.subr.mxu0 0.0
        %1266 = vmatpush1.msra.mxu0 0.0
        %1267 = vmatprep.subr.mxu0 0.0
        %1268 = vmatpush1.msra.mxu0 0.0
        %1269 = vmatprep.subr.mxu0 0.0
        %1270 = vmatpush1.msra.mxu0 0.0
        %1271 = vmatprep.subr.mxu0 0.0
        %1272 = vmatpush1.msra.mxu0 0.0
        %1273 = vmatprep.subr.mxu0 0.0
        %1274 = vmatpush1.msra.mxu0 0.0
        %1275 = vmatprep.subr.mxu0 0.0
        %1276 = vmatpush1.msra.mxu0 0.0
        %1277 = vmatprep.subr.mxu0 0.0
        %1278 = vmatpush1.msra.mxu0 0.0
        %1279 = vmatprep.subr.mxu0 0.0
        %1280 = vmatpush1.msra.mxu0 0.0
        %1281 = vmatprep.subr.mxu0 0.0
        %1282 = vmatpush1.msra.mxu0 0.0
        %1283 = vmatprep.subr.mxu0 0.0
        %1284 = vmatpush1.msra.mxu0 0.0
        %1285 = vmatprep.subr.mxu0 0.0
        %1286 = vmatpush1.msra.mxu0 0.0
        %1287 = vmatprep.subr.mxu0 0.0
        %1288 = vmatpush1.msra.mxu0 0.0
        %1289 = vmatprep.subr.mxu0 0.0
        %1290 = vmatpush1.msra.mxu0 0.0
        %1291 = vmatprep.subr.mxu0 0.0
        %1292 = vmatpush1.msra.mxu0 0.0
        %1293 = vmatprep.subr.mxu0 0.0
        %1294 = vmatpush1.msra.mxu0 0.0
        %1295 = vmatprep.mubr.f32.mxu0 0.0
        %1296 = vmatmul.mubr.f32.gmra.mrb[0].mxu0 %v1229
        %v1297 = vpop.f32.mrb[0].mxu0
        %v1298 = vadd.f32 0.0, %v1297
        %v1299 = vpop.f32.mrb[0].mxu0
        %1300 = vdwg.mxu0
        %1302 = vrot.lane.b32.xlu0 %v1298, 16
        %v1303 = vpop.permute.xlu0 %1302
        %vm1305 = vcmask 195712
        %1306 = vst.msk [vmem:[#allocation2] sm:$0xff] %vm1305, %v1303
        %1307 = vrot.lane.b32.xlu0 %v637, 104
        %v1308 = vpop.permute.xlu0 %1307
        %1309 = vrot.lane.b32.xlu0 %v714, 104
        %v1310 = vpop.permute.xlu0 %1309
        %v1311 = vsel %vm794, %v1308, 0
        %v1313 = vsel %vm794, %v1310, 0
        %1315 = vmatprep.subr.mxu0 0.0
        %1316 = vmatpush1.xpose.msra.mxu0 %v1313
        %1317 = vmatprep.subr.mxu0 0.0
        %1318 = vmatpush1.xpose.msra.mxu0 0.0
        %1319 = vmatprep.subr.mxu0 0.0
        %1320 = vmatpush1.xpose.msra.mxu0 0.0
        %1321 = vmatprep.subr.mxu0 0.0
        %1322 = vmatpush1.xpose.msra.mxu0 0.0
        %1323 = vmatprep.subr.mxu0 0.0
        %1324 = vmatpush1.xpose.msra.mxu0 0.0
        %1325 = vmatprep.subr.mxu0 0.0
        %1326 = vmatpush1.xpose.msra.mxu0 0.0
        %1327 = vmatprep.subr.mxu0 0.0
        %1328 = vmatpush1.xpose.msra.mxu0 0.0
        %1329 = vmatprep.subr.mxu0 0.0
        %1330 = vmatpush1.xpose.msra.mxu0 0.0
        %1331 = vmatprep.subr.mxu0 0.0
        %1332 = vmatpush1.xpose.msra.mxu0 0.0
        %1333 = vmatprep.subr.mxu0 0.0
        %1334 = vmatpush1.xpose.msra.mxu0 0.0
        %1335 = vmatprep.subr.mxu0 0.0
        %1336 = vmatpush1.xpose.msra.mxu0 0.0
        %1337 = vmatprep.subr.mxu0 0.0
        %1338 = vmatpush1.xpose.msra.mxu0 0.0
        %1339 = vmatprep.subr.mxu0 0.0
        %1340 = vmatpush1.xpose.msra.mxu0 0.0
        %1341 = vmatprep.subr.mxu0 0.0
        %1342 = vmatpush1.xpose.msra.mxu0 0.0
        %1343 = vmatprep.subr.mxu0 0.0
        %1344 = vmatpush1.xpose.msra.mxu0 0.0
        %1345 = vmatprep.subr.mxu0 0.0
        %1346 = vmatpush1.xpose.msra.mxu0 0.0
        %1347 = vmatprep.subr.mxu0 0.0
        %1348 = vmatpush1.xpose.msra.mxu0 0.0
        %1349 = vmatprep.subr.mxu0 0.0
        %1350 = vmatpush1.xpose.msra.mxu0 0.0
        %1351 = vmatprep.subr.mxu0 0.0
        %1352 = vmatpush1.xpose.msra.mxu0 0.0
        %1353 = vmatprep.subr.mxu0 0.0
        %1354 = vmatpush1.xpose.msra.mxu0 0.0
        %1355 = vmatprep.subr.mxu0 0.0
        %1356 = vmatpush1.xpose.msra.mxu0 0.0
        %1357 = vmatprep.subr.mxu0 0.0
        %1358 = vmatpush1.xpose.msra.mxu0 0.0
        %1359 = vmatprep.subr.mxu0 0.0
        %1360 = vmatpush1.xpose.msra.mxu0 0.0
        %1361 = vmatprep.subr.mxu0 0.0
        %1362 = vmatpush1.xpose.msra.mxu0 0.0
        %1363 = vmatprep.subr.mxu0 0.0
        %1364 = vmatpush1.xpose.msra.mxu0 0.0
        %1365 = vmatprep.subr.mxu0 0.0
        %1366 = vmatpush1.xpose.msra.mxu0 0.0
        %1367 = vmatprep.subr.mxu0 0.0
        %1368 = vmatpush1.xpose.msra.mxu0 0.0
        %1369 = vmatprep.subr.mxu0 0.0
        %1370 = vmatpush1.xpose.msra.mxu0 0.0
        %1371 = vmatprep.subr.mxu0 0.0
        %1372 = vmatpush1.xpose.msra.mxu0 0.0
        %1373 = vmatprep.subr.mxu0 0.0
        %1374 = vmatpush1.xpose.msra.mxu0 0.0
        %1375 = vmatprep.subr.mxu0 0.0
        %1376 = vmatpush1.xpose.msra.mxu0 0.0
        %1377 = vmatprep.subr.mxu0 0.0
        %1378 = vmatpush1.xpose.msra.mxu0 0.0
        %1379 = vmatprep.mubr.f32.mxu0 0.0
        %1380 = vmatmul.mubr.f32.gmra.mrb[0].mxu0 %v1311
        %v1381 = vpop.f32.mrb[0].mxu0
        %v1382 = vadd.f32 0.0, %v1381
        %v1383 = vpop.f32.mrb[0].mxu0
        %1384 = vdwg.mxu0
        %v1385 = vsel %vm794, %v1382, -inf
        %1386 = vmax.xlane.f32.xlu0 %v1385
        %v1387 = vpop.xlane.xlu0 %1386
        %v1388 = vsub.f32 %v1382, %v1387
        %v1389 = vmul.f32 %v1388, 1.442695
        %v1390 = vpow.pop %v1389
        %v1391 = vsel %vm794, %v1390, 0.0
        %1392 = vadd.xlane.f32.xlu0 %v1391
        %v1393 = vpop.xlane.xlu0 %1392
        %v1394 = vrcp.pop %v1393
        %v1395 = vmul.f32 1.0, %v1394
        %v1396 = vmul.f32 %v1390, %v1395
        %s1397 = scalar_lea.vmem %s558, 24 [#allocation19]
        %1398 = vst.msk [vmem:[%s1397] sm:$0xff] %vm794, %v1396
        %1399 = vrot.lane.b32.xlu0 %v791, 104
        %v1400 = vpop.permute.xlu0 %1399
        %v1403 = vsel %vm794, %v1396, 0
        %1405 = vmatprep.subr.mxu0 0.0
        %1406 = vmatpush1.msra.mxu0 %v1400
        %1407 = vmatprep.subr.mxu0 0.0
        %1408 = vmatpush1.msra.mxu0 0.0
        %1409 = vmatprep.subr.mxu0 0.0
        %1410 = vmatpush1.msra.mxu0 0.0
        %1411 = vmatprep.subr.mxu0 0.0
        %1412 = vmatpush1.msra.mxu0 0.0
        %1413 = vmatprep.subr.mxu0 0.0
        %1414 = vmatpush1.msra.mxu0 0.0
        %1415 = vmatprep.subr.mxu0 0.0
        %1416 = vmatpush1.msra.mxu0 0.0
        %1417 = vmatprep.subr.mxu0 0.0
        %1418 = vmatpush1.msra.mxu0 0.0
        %1419 = vmatprep.subr.mxu0 0.0
        %1420 = vmatpush1.msra.mxu0 0.0
        %1421 = vmatprep.subr.mxu0 0.0
        %1422 = vmatpush1.msra.mxu0 0.0
        %1423 = vmatprep.subr.mxu0 0.0
        %1424 = vmatpush1.msra.mxu0 0.0
        %1425 = vmatprep.subr.mxu0 0.0
        %1426 = vmatpush1.msra.mxu0 0.0
        %1427 = vmatprep.subr.mxu0 0.0
        %1428 = vmatpush1.msra.mxu0 0.0
        %1429 = vmatprep.subr.mxu0 0.0
        %1430 = vmatpush1.msra.mxu0 0.0
        %1431 = vmatprep.subr.mxu0 0.0
        %1432 = vmatpush1.msra.mxu0 0.0
        %1433 = vmatprep.subr.mxu0 0.0
        %1434 = vmatpush1.msra.mxu0 0.0
        %1435 = vmatprep.subr.mxu0 0.0
        %1436 = vmatpush1.msra.mxu0 0.0
        %1437 = vmatprep.subr.mxu0 0.0
        %1438 = vmatpush1.msra.mxu0 0.0
        %1439 = vmatprep.subr.mxu0 0.0
        %1440 = vmatpush1.msra.mxu0 0.0
        %1441 = vmatprep.subr.mxu0 0.0
        %1442 = vmatpush1.msra.mxu0 0.0
        %1443 = vmatprep.subr.mxu0 0.0
        %1444 = vmatpush1.msra.mxu0 0.0
        %1445 = vmatprep.subr.mxu0 0.0
        %1446 = vmatpush1.msra.mxu0 0.0
        %1447 = vmatprep.subr.mxu0 0.0
        %1448 = vmatpush1.msra.mxu0 0.0
        %1449 = vmatprep.subr.mxu0 0.0
        %1450 = vmatpush1.msra.mxu0 0.0
        %1451 = vmatprep.subr.mxu0 0.0
        %1452 = vmatpush1.msra.mxu0 0.0
        %1453 = vmatprep.subr.mxu0 0.0
        %1454 = vmatpush1.msra.mxu0 0.0
        %1455 = vmatprep.subr.mxu0 0.0
        %1456 = vmatpush1.msra.mxu0 0.0
        %1457 = vmatprep.subr.mxu0 0.0
        %1458 = vmatpush1.msra.mxu0 0.0
        %1459 = vmatprep.subr.mxu0 0.0
        %1460 = vmatpush1.msra.mxu0 0.0
        %1461 = vmatprep.subr.mxu0 0.0
        %1462 = vmatpush1.msra.mxu0 0.0
        %1463 = vmatprep.subr.mxu0 0.0
        %1464 = vmatpush1.msra.mxu0 0.0
        %1465 = vmatprep.subr.mxu0 0.0
        %1466 = vmatpush1.msra.mxu0 0.0
        %1467 = vmatprep.subr.mxu0 0.0
        %1468 = vmatpush1.msra.mxu0 0.0
        %1469 = vmatprep.mubr.f32.mxu0 0.0
        %1470 = vmatmul.mubr.f32.gmra.mrb[0].mxu0 %v1403
        %v1471 = vpop.f32.mrb[0].mxu0
        %v1472 = vadd.f32 0.0, %v1471
        %v1473 = vpop.f32.mrb[0].mxu0
        %1474 = vdwg.mxu0
        %1476 = vrot.lane.b32.xlu0 %v1472, 24
        %v1477 = vpop.permute.xlu0 %1476
        %vm1479 = vcmask 261312
        %1480 = vst.msk [vmem:[#allocation2] sm:$0xff] %vm1479, %v1477
        %v1481 = vld [vmem:[#allocation2] sm:$0xff]
        %v1482 = vld [vmem:[#allocation14] sm:$0xff]
        %v1483 = vld [vmem:[#allocation14 + $0x8] sm:$0xff]
        %v1484 = vld [vmem:[#allocation14 + $0x10] sm:$0xff]
        %v1485 = vld [vmem:[#allocation14 + $0x18] sm:$0xff]
        %v1487 = vsel %vm566, %v1481, 0
        %1489 = vmatprep.subr.mxu0 0.0
        %1490 = vmatpush1.msra.mxu0 %v1482
        %1491 = vmatprep.subr.mxu0 0.0
        %1492 = vmatpush1.msra.mxu0 %v1483
        %1493 = vmatprep.subr.mxu0 0.0
        %1494 = vmatpush1.msra.mxu0 %v1484
        %1495 = vmatprep.subr.mxu0 0.0
        %1496 = vmatpush1.msra.mxu0 %v1485
        %1497 = vmatprep.subr.mxu0 0.0
        %1498 = vmatpush1.msra.mxu0 0.0
        %1499 = vmatprep.subr.mxu0 0.0
        %1500 = vmatpush1.msra.mxu0 0.0
        %1501 = vmatprep.subr.mxu0 0.0
        %1502 = vmatpush1.msra.mxu0 0.0
        %1503 = vmatprep.subr.mxu0 0.0
        %1504 = vmatpush1.msra.mxu0 0.0
        %1505 = vmatprep.subr.mxu0 0.0
        %1506 = vmatpush1.msra.mxu0 0.0
        %1507 = vmatprep.subr.mxu0 0.0
        %1508 = vmatpush1.msra.mxu0 0.0
        %1509 = vmatprep.subr.mxu0 0.0
        %1510 = vmatpush1.msra.mxu0 0.0
        %1511 = vmatprep.subr.mxu0 0.0
        %1512 = vmatpush1.msra.mxu0 0.0
        %1513 = vmatprep.subr.mxu0 0.0
        %1514 = vmatpush1.msra.mxu0 0.0
        %1515 = vmatprep.subr.mxu0 0.0
        %1516 = vmatpush1.msra.mxu0 0.0
        %1517 = vmatprep.subr.mxu0 0.0
        %1518 = vmatpush1.msra.mxu0 0.0
        %1519 = vmatprep.subr.mxu0 0.0
        %1520 = vmatpush1.msra.mxu0 0.0
        %1521 = vmatprep.subr.mxu0 0.0
        %1522 = vmatpush1.msra.mxu0 0.0
        %1523 = vmatprep.subr.mxu0 0.0
        %1524 = vmatpush1.msra.mxu0 0.0
        %1525 = vmatprep.subr.mxu0 0.0
        %1526 = vmatpush1.msra.mxu0 0.0
        %1527 = vmatprep.subr.mxu0 0.0
        %1528 = vmatpush1.msra.mxu0 0.0
        %1529 = vmatprep.subr.mxu0 0.0
        %1530 = vmatpush1.msra.mxu0 0.0
        %1531 = vmatprep.subr.mxu0 0.0
        %1532 = vmatpush1.msra.mxu0 0.0
        %1533 = vmatprep.subr.mxu0 0.0
        %1534 = vmatpush1.msra.mxu0 0.0
        %1535 = vmatprep.subr.mxu0 0.0
        %1536 = vmatpush1.msra.mxu0 0.0
        %1537 = vmatprep.subr.mxu0 0.0
        %1538 = vmatpush1.msra.mxu0 0.0
        %1539 = vmatprep.subr.mxu0 0.0
        %1540 = vmatpush1.msra.mxu0 0.0
        %1541 = vmatprep.subr.mxu0 0.0
        %1542 = vmatpush1.msra.mxu0 0.0
        %1543 = vmatprep.subr.mxu0 0.0
        %1544 = vmatpush1.msra.mxu0 0.0
        %1545 = vmatprep.subr.mxu0 0.0
        %1546 = vmatpush1.msra.mxu0 0.0
        %1547 = vmatprep.subr.mxu0 0.0
        %1548 = vmatpush1.msra.mxu0 0.0
        %1549 = vmatprep.subr.mxu0 0.0
        %1550 = vmatpush1.msra.mxu0 0.0
        %1551 = vmatprep.subr.mxu0 0.0
        %1552 = vmatpush1.msra.mxu0 0.0
        %1553 = vmatprep.mubr.f32.mxu0 0.0
        %1554 = vmatmul.mubr.f32.gmra.mrb[0].mxu0 %v1487
        %v1555 = vpop.f32.mrb[0].mxu0
        %v1556 = vadd.f32 %v559, %v1555
        %v1557 = vpop.f32.mrb[0].mxu0
        %1558 = vdwg.mxu0
        %v1559 = vsel %vm566, %v1556, 0.0
        %1560 = vadd.xlane.f32.xlu0 %v1559
        %v1561 = vpop.xlane.xlu0 %1560
        %v1562 = vrcp.pop 32.0
        %v1563 = vmul.f32 %v1561, %v1562
        %v1564 = vsub.f32 %v1556, %v1563
        %v1565 = vmul.f32 %v1564, %v1564
        %v1566 = vsel %vm566, %v1565, 0.0
        %1567 = vadd.xlane.f32.xlu0 %v1566
        %v1568 = vpop.xlane.xlu0 %1567
        %v1569 = vmul.f32 %v1568, %v1562
        %v1570 = vadd.f32 %v1569, 1e-06
        %v1571 = vrsqrt.pop %v1570
        %v1572 = vmul.f32 %v1564, %v1571
        %v1573 = vld [vmem:[#allocation15] sm:$0x1]
        %v1575 = vlaneseq
        %v1576 = vshrl.u32 %v1575, 7
        %v1577 = vsub.s32 0, %v1576
        %v1578 = vrot.slane %v1573, %v1577
        %v1580 = vmul.f32 %v1572, %v1578
        %v1581 = vld [vmem:[#allocation17] sm:$0x1]
        %v1583 = vlaneseq
        %v1584 = vshrl.u32 %v1583, 7
        %v1585 = vsub.s32 0, %v1584
        %v1586 = vrot.slane %v1581, %v1585
        %v1588 = vadd.f32 %v1580, %v1586
        %1589 = vst.msk [vmem:[%s551] sm:$0xff] %vm566, %v1588
        %s1590 = sand.u32 %s265, 1
        %s1591 = scalar_lea.sflag [#allocation5], %s1590
        %s1592 = sand.u32 %s265, 1
        %s1593 = smul.addr %s1592, 8
        %s1594 = scalar_lea.vmem [#allocation18], %s1593
        %s1595 = sand.u32 %s293, 1
        %s1596 = scalar_lea.sflag [#allocation20], %s1595
        %s1597 = sand.u32 %s293, 1
        %s1598 = smul.addr %s1597, 32
        %s1599 = scalar_lea.vmem [#allocation19], %s1598
        // Predicated region
        $region93: #{tpu_custom_call.1} parent=55 // pred_check
          %p1600 = pneg %p275
        $region94: #{tpu_custom_call.1} parent=55 // pred_check_branch
          %1602 = sbr.rel (%p1600) target = $region96
        $region95: #{tpu_custom_call.1} parent=55 // pred_region
          %s1604 = ssub.s32 128, 128
          %1605 = vsyncadd %s1591, %s1604
          %s1606 = sadd.s32 %s42, %s41
          %s1607 = smul.addr %s1606, 128
          %s1608 = scalar_lea.hbm %s9, %s1607
          %s1610 = sshll.u32 %s1594, 4
          %s1611 = int_to_ptr.vmem [resolvable:$true] %s1610
          %1613 = dma.vmem_to_hbm [thread:$0]  %s1611, 128, %s1608, %s1591
        $region96: #{tpu_custom_call.1} parent=55 // pred_fallthru
          _
        // Predicated region
        $region97: #{tpu_custom_call.1} parent=55 // pred_check
          %p1614 = pneg %p303
        $region98: #{tpu_custom_call.1} parent=55 // pred_check_branch
          %1616 = sbr.rel (%p1614) target = $region100
        $region99: #{tpu_custom_call.1} parent=55 // pred_region
          %s1618 = ssub.s32 512, 512
          %1619 = vsyncadd %s1596, %s1618
          %s1620 = smul.addr %s41, 4
          %s1621 = sadd.s32 %s42, %s1620
          %s1622 = smul.addr %s1621, 128
          %s1623 = scalar_lea.hbm %s10, %s1622
          %s1624 = sshll.u32 %s1599, 4
          %s1625 = int_to_ptr.vmem [resolvable:$true] %s1624
          %1630 = dma.vmem_to_hbm [thread:$0]  %s1625, 512, %s1623, %s1596, 128, 128, 8
        $region100: #{tpu_custom_call.1} parent=55 // pred_fallthru
          _
      $region56: #{tpu_custom_call.1} parent=5 // pred_fallthru
        _
      %p1631 = scmp.le.s32.totalorder 2, %s32
      // Predicated region
      $region101: #{tpu_custom_call.1} parent=5 // pred_check
        %p1632 = pneg %p1631
      $region102: #{tpu_custom_call.1} parent=5 // pred_check_branch
        %1634 = sbr.rel (%p1632) target = $region104
      $region103: #{tpu_custom_call.1} parent=5 // pred_region
        %s1635 = ssub.s32 %s32, 2
        // Predicated region
        $region105: #{tpu_custom_call.1} parent=103 // pred_check
          %p1636 = pneg %p281
        $region106: #{tpu_custom_call.1} parent=103 // pred_check_branch
          %1638 = sbr.rel (%p1636) target = $region108
        $region107: #{tpu_custom_call.1} parent=103 // pred_region
          %s1639 = sand.u32 %s266, 1
          %s1640 = scalar_lea.sflag [#allocation5], %s1639
          %s1641 = sand.u32 %s266, 1
          %s1642 = smul.addr %s1641, 8
          %s1643 = scalar_lea.vmem [#allocation18], %s1642
          %1644 = dma.done %s1640, 128
        $region108: #{tpu_custom_call.1} parent=103 // pred_fallthru
          _
        // Predicated region
        $region109: #{tpu_custom_call.1} parent=103 // pred_check
          %p1645 = pneg %p309
        $region110: #{tpu_custom_call.1} parent=103 // pred_check_branch
          %1647 = sbr.rel (%p1645) target = $region112
        $region111: #{tpu_custom_call.1} parent=103 // pred_region
          %s1648 = sand.u32 %s294, 1
          %s1649 = scalar_lea.sflag [#allocation20], %s1648
          %s1650 = sand.u32 %s294, 1
          %s1651 = smul.addr %s1650, 32
          %s1652 = scalar_lea.vmem [#allocation19], %s1651
          %1653 = dma.done %s1649, 512
        $region112: #{tpu_custom_call.1} parent=103 // pred_fallthru
          _
      $region104: #{tpu_custom_call.1} parent=5 // pred_fallthru
        _
    $region6: #{tpu_custom_call.1} parent=1 // loop_footer
      %s36 = sadd.s32 1, %s32
    $region7: #{tpu_custom_call.1} parent=1 // loop_footer_branch
      %31 = sbr.rel target = $region3
    $region8: #{tpu_custom_call.1} parent=1 // loop_exit
      _
    %1654 = vsyncpa [#allocation4], 1
    %s1655 = scalar_lea.sflag [#allocation4], 1
    %1656 = vsyncpa %s1655, 1
    %1657 = vsyncpa [#allocation7], 1
    %s1658 = scalar_lea.sflag [#allocation7], 1
    %1659 = vsyncpa %s1658, 1
    %1660 = vsyncpa [#allocation10], 1
    %1661 = vsyncpa [#allocation13], 1
    %1662 = vsyncpa [#allocation16], 1
    %1663 = vsyncpa [#allocation5], 1
    %s1664 = scalar_lea.sflag [#allocation5], 1
    %1665 = vsyncpa %s1664, 1
    %1666 = vsyncpa [#allocation20], 1
    %s1667 = scalar_lea.sflag [#allocation20], 1
    %1668 = vsyncpa %s1667, 1

</llo_original>
